<compile_context>
chip_gen: v6e
topology: v6e:2x2x1
jax: 0.10.0
libtpu: 0.0.40
codegen_flags: <defaults>
</compile_context>

<pallas_src>
import functools
import math

import jax
import jax.numpy as jnp
from jax.experimental import pallas as pl
from jax.experimental.pallas import tpu as pltpu


def _pma_mab_kernel(x_ref, mask_ref, s_ref,
                    wq_ref, bq_ref, wk_ref, bk_ref, wv_ref, bv_ref,
                    wo_ref, bo_ref, hsum_ref, hexp_ref,
                    o_ref, *, num_heads, scale):
    bt, nk, dim_k = x_ref.shape
    dim_v = wq_ref.shape[1]

    x2d = x_ref[...].reshape(bt * nk, dim_k)          # (Bt*Nk, dim_K), activation dtype
    mask = mask_ref[...]                              # (Bt, Nk, 1), f32 (0/1)

    # Shared seed projection (PMA num_seeds == 1): one (1, dim_V) row per step.
    q = (jnp.dot(s_ref[...], wq_ref[...], preferred_element_type=jnp.float32)
         + bq_ref[...])                               # (1, dim_V) f32
    qs = q * scale                                    # scale only the score path

    # Key / value projections over the whole batch block in single MXU calls.
    kp = (jnp.dot(x2d, wk_ref[...], preferred_element_type=jnp.float32)
          + bk_ref[...])                              # (Bt*Nk, dim_V) f32
    vp = (jnp.dot(x2d, wv_ref[...], preferred_element_type=jnp.float32)
          + bv_ref[...])                              # (Bt*Nk, dim_V) f32

    # Per-head scores: segment-sum each head's ds lanes with a 0/1 selector:
    #   scores[b,k,h] = mask[b,k] * sum_d qs[h*ds+d] * kp[b*Nk+k, h*ds+d]
    # (mask applied after the sum == K*M in the module, since M is per-row).
    scores = jnp.dot(kp * qs, hsum_ref[...],
                     preferred_element_type=jnp.float32)        # (Bt*Nk, H)
    scores = scores.reshape(bt, nk, num_heads) * mask            # (Bt, Nk, H)

    # Softmax over the key axis, per batch element and head.
    smax = jnp.max(scores, axis=1, keepdims=True)
    p = jnp.exp(scores - smax)
    denom = jnp.sum(p, axis=1, keepdims=True)
    p = p * pl.reciprocal(denom, approx=True)          # EUP slot, frees VALU

    # attn[b, j] = sum_k p[b, k, head(j)] * vp[b, k, j]
    pexp = jnp.dot(p.reshape(bt * nk, num_heads), hexp_ref[...],
                   preferred_element_type=jnp.float32)           # (Bt*Nk, dim_V)
    attn = jnp.sum((pexp * vp).reshape(bt, nk, dim_v),
                   axis=1, keepdims=True).reshape(bt, dim_v)     # (Bt, dim_V)

    o = q + attn                                      # residual with UNscaled seed proj
    of = (jnp.dot(o.astype(wo_ref.dtype), wo_ref[...],
                  preferred_element_type=jnp.float32) + bo_ref[...])
    o = o + jnp.maximum(of, 0.0)                      # O + relu(fc_o(O)); ln=False
    o_ref[...] = o.astype(o_ref.dtype)


def _choose_block_b(B, Nk, dim_K, dim_V, itemsize, vmem_budget=8 * 1024 * 1024):
    """Largest batch block that divides B, keeps the BlockSpec legal
    (multiple of 8 sublanes or the full batch), fits a conservative VMEM
    budget, and (when possible) leaves >= 2 grid steps for megacore."""
    per_elem = (2 * itemsize * Nk * dim_K              # pipelined hidden-state input
                + 2 * 4096 * ((Nk + 7) // 8)           # pipelined (Bt,Nk,1) mask tile
                + 4 * Nk * 6 * dim_V                   # f32 in-kernel intermediates
                + 2 * 4 * dim_V)                       # pipelined output row
    cap = max(8, vmem_budget // max(per_elem, 1))
    if B >= 16:
        cap = min(cap, B // 2)                         # keep both TensorCores busy
    cand = [bt for bt in range(1, min(B, cap) + 1)
            if B % bt == 0 and (bt % 8 == 0 or bt == B)]
    return max(cand) if cand else B


def pooling_pma_forward(hidden_states, attention_mask, seed, params, num_heads,
                        block_b=None):
    """Pooling.forward with pooling_mode='pma<num_heads>' (ln=False).
    Returns the (B, hidden) PMA-pooled vectors."""
    B, Nk, dim_K = hidden_states.shape
    dim_V, dim_Q = params["wq"].shape
    assert dim_V % num_heads == 0
    ds = dim_V // num_heads

    dtype = hidden_states.dtype
    itemsize = jnp.dtype(dtype).itemsize
    if block_b is None:
        block_b = _choose_block_b(B, Nk, dim_K, dim_V, itemsize)
    assert B % block_b == 0 and (block_b % 8 == 0 or block_b == B)

    # One-time XLA-side layout plumbing (not per-grid-step work):
    #  * weights pre-transposed to (in, out), cast to the activation dtype,
    #  * constant 0/1 head selector matrices for the segment sums,
    #  * mask as (B, Nk, 1) f32 instead of the (B, Nk, dim_V) expanded tensor.
    wq_t = params["wq"].T.astype(dtype)               # (dim_Q, dim_V)
    wk_t = params["wk"].T.astype(dtype)               # (dim_K, dim_V)
    wv_t = params["wv"].T.astype(dtype)               # (dim_K, dim_V)
    wo_t = params["wo"].T.astype(dtype)               # (dim_V, dim_V)
    bq = params["bq"].reshape(1, dim_V).astype(jnp.float32)
    bk = params["bk"].reshape(1, dim_V).astype(jnp.float32)
    bv = params["bv"].reshape(1, dim_V).astype(jnp.float32)
    bo = params["bo"].reshape(1, dim_V).astype(jnp.float32)
    seed2d = seed.reshape(1, dim_Q).astype(dtype)
    mask3d = attention_mask.reshape(B, Nk, 1).astype(jnp.float32)

    head_ids = jnp.arange(dim_V, dtype=jnp.int32) // ds
    head_sum = (head_ids[:, None] == jnp.arange(num_heads, dtype=jnp.int32)[None, :]
                ).astype(jnp.float32)                 # (dim_V, H)
    head_expand = head_sum.T                          # (H, dim_V)

    kernel = functools.partial(_pma_mab_kernel, num_heads=num_heads,
                               scale=1.0 / math.sqrt(dim_V))

    def resident(x):
        # Same (full) block every grid step: fetched once, stays in VMEM.
        return pl.BlockSpec(x.shape, lambda b: (0, 0))

    return pl.pallas_call(
        kernel,
        out_shape=jax.ShapeDtypeStruct((B, dim_V), dtype),
        grid=(B // block_b,),
        in_specs=[
            pl.BlockSpec((block_b, Nk, dim_K), lambda b: (b, 0, 0)),  # hidden states
            pl.BlockSpec((block_b, Nk, 1), lambda b: (b, 0, 0)),      # attention mask
            resident(seed2d),
            resident(wq_t), resident(bq),
            resident(wk_t), resident(bk),
            resident(wv_t), resident(bv),
            resident(wo_t), resident(bo),
            resident(head_sum), resident(head_expand),
        ],
        out_specs=pl.BlockSpec((block_b, dim_V), lambda b: (b, 0)),
        compiler_params=pltpu.CompilerParams(
            dimension_semantics=("parallel",),
            vmem_limit_bytes=32 * 1024 * 1024),
    )(hidden_states, mask3d, seed2d,
      wq_t, bq, wk_t, bk, wv_t, bv, wo_t, bo, head_sum, head_expand)


def pooling_pma_reference(hidden_states, attention_mask, seed, params, num_heads):
    """Pure-JAX transliteration of the torch Pooling pma path (PMA -> MAB, ln=False)."""
    hidden_states = hidden_states.astype(jnp.float32)
    dim_V = params["wq"].shape[0]
    B, Nk, _ = hidden_states.shape
    ds = dim_V // num_heads
    Q = jnp.broadcast_to(seed.reshape(1, 1, -1).astype(jnp.float32),
                         (B, 1, seed.shape[-1]))                     # S.repeat(B,1,1)
    M = jnp.broadcast_to(attention_mask[:, :, None].astype(jnp.float32),
                         hidden_states.shape)                        # mask expand
    Qp = Q @ params["wq"].T + params["bq"]
    Kp = hidden_states @ params["wk"].T + params["bk"]
    Vp = hidden_states @ params["wv"].T + params["bv"]
    Kp = Kp * M

    def stackheads(x):
        return jnp.concatenate([x[:, :, h * ds:(h + 1) * ds]
                                for h in range(num_heads)], axis=0)

    Q_, K_, V_ = stackheads(Qp), stackheads(Kp), stackheads(Vp)
    A = jax.nn.softmax(jnp.einsum("bqd,bkd->bqk", Q_, K_) / math.sqrt(dim_V), axis=2)
    O_ = Q_ + jnp.einsum("bqk,bkd->bqd", A, V_)
    O = jnp.concatenate([O_[h * B:(h + 1) * B] for h in range(num_heads)], axis=2)
    O = O + jax.nn.relu(O @ params["wo"].T + params["bo"])
    return O[:, 0, :]                                  # squeeze(1); single pooling mode


if __name__ == "__main__":
    # Small shapes consistent with Pooling(hidden_size=32, pooling_mode="pma4"):
    # hidden_states (B, seq, hidden), attention_mask (B, seq); PMA num_seeds = 1.
    B, seq, hidden, num_heads = 16, 8, 32, 4

    key = jax.random.PRNGKey(0)
    ks = jax.random.split(key, 11)

    def lin_init(kw, kb, out_dim, in_dim):
        bound = 1.0 / math.sqrt(in_dim)
        w = jax.random.uniform(kw, (out_dim, in_dim), jnp.float32, -bound, bound)
        b = jax.random.uniform(kb, (1, out_dim), jnp.float32, -bound, bound)
        return w, b

    wq, bq = lin_init(ks[0], ks[1], hidden, hidden)
    wk, bk = lin_init(ks[2], ks[3], hidden, hidden)
    wv, bv = lin_init(ks[4], ks[5], hidden, hidden)
    wo, bo = lin_init(ks[6], ks[7], hidden, hidden)
    params = dict(wq=wq, bq=bq, wk=wk, bk=bk, wv=wv, bv=bv, wo=wo, bo=bo)

    # PMA seed S: (1, num_seeds=1, dim) xavier_uniform -> stored here as (1, dim).
    xav = math.sqrt(6.0 / (1 + hidden))
    seed = jax.random.uniform(ks[8], (1, hidden), jnp.float32, -xav, xav)

    hidden_states = jax.random.normal(ks[9], (B, seq, hidden), jnp.float32)
    attention_mask = (jax.random.uniform(ks[10], (B, seq)) > 0.25).astype(jnp.float32)

    out = jax.block_until_ready(
        pooling_pma_forward(hidden_states, attention_mask, seed, params, num_heads))
    ref = pooling_pma_reference(hidden_states, attention_mask, seed, params, num_heads)

    assert out.shape == (B, hidden)
    # Tolerance covers the EUP approximate-reciprocal softmax normalisation.
    assert jnp.allclose(out, ref, rtol=2e-3, atol=2e-3), "f32 mismatch vs reference"

    # bf16 matmul path (v5e/v6e/v7x MXU-friendly): activations + weights in bf16,
    # softmax / accumulation stay f32 inside the kernel.
    out_bf16 = jax.block_until_ready(
        pooling_pma_forward(hidden_states.astype(jnp.bfloat16), attention_mask,
                            seed, params, num_heads))
    assert out_bf16.shape == (B, hidden)
    assert jnp.allclose(out_bf16.astype(jnp.float32), ref, rtol=1e-1, atol=1e-1), \
        "bf16 mismatch vs reference"

    # TODO(synk): ln=True (LayerNorm ln0/ln1) branch and the trivial mean/max/cls
    # pooling modes are not implemented; the Pooling pma path uses ln=False.
    print("KERNEL_OK")
</pallas_src>

<mosaic_0001>
module attributes {stable_mosaic.version = 11 : i64} {
  func.func @_pma_mab_kernel(%arg0: i32, %arg1: memref<8x8x32xf32, #tpu.memory_space<vmem>>, %arg2: memref<8x8x1xf32, #tpu.memory_space<vmem>>, %arg3: memref<1x32xf32, #tpu.memory_space<vmem>>, %arg4: memref<32x32xf32, #tpu.memory_space<vmem>>, %arg5: memref<1x32xf32, #tpu.memory_space<vmem>>, %arg6: memref<32x32xf32, #tpu.memory_space<vmem>>, %arg7: memref<1x32xf32, #tpu.memory_space<vmem>>, %arg8: memref<32x32xf32, #tpu.memory_space<vmem>>, %arg9: memref<1x32xf32, #tpu.memory_space<vmem>>, %arg10: memref<32x32xf32, #tpu.memory_space<vmem>>, %arg11: memref<1x32xf32, #tpu.memory_space<vmem>>, %arg12: memref<32x4xf32, #tpu.memory_space<vmem>>, %arg13: memref<4x32xf32, #tpu.memory_space<vmem>>, %arg14: memref<8x32xf32, #tpu.memory_space<vmem>>) attributes {dimension_semantics = [#tpu.dimension_semantics<parallel>], iteration_bounds = array<i64: 2>, scalar_prefetch = 0 : i64, scratch_operands = 0 : i64, tpu.core_type = #tpu.core_type<tc>, window_params = [{transform_indices = @transform_0, window_bounds = array<i64: 8, 8, 32>}, {transform_indices = @transform_1, window_bounds = array<i64: 8, 8, 1>}, {pipeline_mode = #tpu.pipeline_mode<synchronous>, transform_indices = @transform_2, window_bounds = array<i64: 1, 32>}, {pipeline_mode = #tpu.pipeline_mode<synchronous>, transform_indices = @transform_3, window_bounds = array<i64: 32, 32>}, {pipeline_mode = #tpu.pipeline_mode<synchronous>, transform_indices = @transform_4, window_bounds = array<i64: 1, 32>}, {pipeline_mode = #tpu.pipeline_mode<synchronous>, transform_indices = @transform_5, window_bounds = array<i64: 32, 32>}, {pipeline_mode = #tpu.pipeline_mode<synchronous>, transform_indices = @transform_6, window_bounds = array<i64: 1, 32>}, {pipeline_mode = #tpu.pipeline_mode<synchronous>, transform_indices = @transform_7, window_bounds = array<i64: 32, 32>}, {pipeline_mode = #tpu.pipeline_mode<synchronous>, transform_indices = @transform_8, window_bounds = array<i64: 1, 32>}, {pipeline_mode = #tpu.pipeline_mode<synchronous>, transform_indices = @transform_9, window_bounds = array<i64: 32, 32>}, {pipeline_mode = #tpu.pipeline_mode<synchronous>, transform_indices = @transform_10, window_bounds = array<i64: 1, 32>}, {pipeline_mode = #tpu.pipeline_mode<synchronous>, transform_indices = @transform_11, window_bounds = array<i64: 32, 4>}, {pipeline_mode = #tpu.pipeline_mode<synchronous>, transform_indices = @transform_12, window_bounds = array<i64: 4, 32>}, {transform_indices = @transform_13, window_bounds = array<i64: 8, 32>}]} {
    %c0 = arith.constant 0 : index
    %c0_0 = arith.constant 0 : index
    %c0_1 = arith.constant 0 : index
    %0 = vector.load %arg1[%c0, %c0_0, %c0_1] : memref<8x8x32xf32, #tpu.memory_space<vmem>>, vector<8x8x32xf32>
    %1 = vector.shape_cast %0 : vector<8x8x32xf32> to vector<64x32xf32>
    %c0_2 = arith.constant 0 : index
    %c0_3 = arith.constant 0 : index
    %c0_4 = arith.constant 0 : index
    %2 = vector.load %arg2[%c0_2, %c0_3, %c0_4] : memref<8x8x1xf32, #tpu.memory_space<vmem>>, vector<8x8x1xf32>
    %c0_5 = arith.constant 0 : index
    %c0_6 = arith.constant 0 : index
    %3 = vector.load %arg3[%c0_5, %c0_6] : memref<1x32xf32, #tpu.memory_space<vmem>>, vector<1x32xf32>
    %c0_7 = arith.constant 0 : index
    %c0_8 = arith.constant 0 : index
    %4 = vector.load %arg4[%c0_7, %c0_8] : memref<32x32xf32, #tpu.memory_space<vmem>>, vector<32x32xf32>
    %cst = arith.constant dense<0.000000e+00> : vector<1x32xf32>
    %5 = tpu.matmul %3, %4, %cst {dimension_numbers = #tpu.dot_dimension_numbers<[1], [0], [0], [1], [0, 0, 1, 1], [], []>} : vector<1x32xf32>, vector<32x32xf32>, vector<1x32xf32> -> vector<1x32xf32>
    %c0_9 = arith.constant 0 : index
    %c0_10 = arith.constant 0 : index
    %6 = vector.load %arg5[%c0_9, %c0_10] : memref<1x32xf32, #tpu.memory_space<vmem>>, vector<1x32xf32>
    %7 = arith.addf %5, %6 : vector<1x32xf32>
    %cst_11 = arith.constant 0.176776692 : f32
    %8 = vector.broadcast %cst_11 : f32 to vector<1x32xf32>
    %9 = arith.mulf %7, %8 : vector<1x32xf32>
    %c0_12 = arith.constant 0 : index
    %c0_13 = arith.constant 0 : index
    %10 = vector.load %arg6[%c0_12, %c0_13] : memref<32x32xf32, #tpu.memory_space<vmem>>, vector<32x32xf32>
    %cst_14 = arith.constant dense<0.000000e+00> : vector<64x32xf32>
    %11 = tpu.matmul %1, %10, %cst_14 {dimension_numbers = #tpu.dot_dimension_numbers<[1], [0], [0], [1], [0, 0, 1, 1], [], []>} : vector<64x32xf32>, vector<32x32xf32>, vector<64x32xf32> -> vector<64x32xf32>
    %c0_15 = arith.constant 0 : index
    %c0_16 = arith.constant 0 : index
    %12 = vector.load %arg7[%c0_15, %c0_16] : memref<1x32xf32, #tpu.memory_space<vmem>>, vector<1x32xf32>
    %13 = vector.broadcast %12 : vector<1x32xf32> to vector<64x32xf32>
    %14 = arith.addf %11, %13 : vector<64x32xf32>
    %c0_17 = arith.constant 0 : index
    %c0_18 = arith.constant 0 : index
    %15 = vector.load %arg8[%c0_17, %c0_18] : memref<32x32xf32, #tpu.memory_space<vmem>>, vector<32x32xf32>
    %cst_19 = arith.constant dense<0.000000e+00> : vector<64x32xf32>
    %16 = tpu.matmul %1, %15, %cst_19 {dimension_numbers = #tpu.dot_dimension_numbers<[1], [0], [0], [1], [0, 0, 1, 1], [], []>} : vector<64x32xf32>, vector<32x32xf32>, vector<64x32xf32> -> vector<64x32xf32>
    %c0_20 = arith.constant 0 : index
    %c0_21 = arith.constant 0 : index
    %17 = vector.load %arg9[%c0_20, %c0_21] : memref<1x32xf32, #tpu.memory_space<vmem>>, vector<1x32xf32>
    %18 = vector.broadcast %17 : vector<1x32xf32> to vector<64x32xf32>
    %19 = arith.addf %16, %18 : vector<64x32xf32>
    %20 = vector.broadcast %9 : vector<1x32xf32> to vector<64x32xf32>
    %21 = arith.mulf %14, %20 : vector<64x32xf32>
    %c0_22 = arith.constant 0 : index
    %c0_23 = arith.constant 0 : index
    %22 = vector.load %arg12[%c0_22, %c0_23] : memref<32x4xf32, #tpu.memory_space<vmem>>, vector<32x4xf32>
    %cst_24 = arith.constant dense<0.000000e+00> : vector<64x4xf32>
    %23 = tpu.matmul %21, %22, %cst_24 {dimension_numbers = #tpu.dot_dimension_numbers<[1], [0], [0], [1], [0, 0, 1, 1], [], []>} : vector<64x32xf32>, vector<32x4xf32>, vector<64x4xf32> -> vector<64x4xf32>
    %24 = vector.shape_cast %23 : vector<64x4xf32> to vector<8x8x4xf32>
    %25 = vector.broadcast %2 : vector<8x8x1xf32> to vector<8x8x4xf32>
    %26 = arith.mulf %24, %25 : vector<8x8x4xf32>
    %cst_25 = arith.constant dense<0xFF800000> : vector<8x4xf32>
    %27 = vector.multi_reduction <maximumf>, %26, %cst_25 [1] : vector<8x8x4xf32> to vector<8x4xf32>
    %28 = vector.shape_cast %27 : vector<8x4xf32> to vector<8x1x4xf32>
    %29 = vector.broadcast %28 : vector<8x1x4xf32> to vector<8x8x4xf32>
    %30 = arith.subf %26, %29 : vector<8x8x4xf32>
    %31 = math.exp %30 : vector<8x8x4xf32>
    %cst_26 = arith.constant dense<0.000000e+00> : vector<8x4xf32>
    %32 = vector.multi_reduction <add>, %31, %cst_26 [1] : vector<8x8x4xf32> to vector<8x4xf32>
    %33 = vector.shape_cast %32 : vector<8x4xf32> to vector<8x1x4xf32>
    %34 = tpu.reciprocal %33 {approx = true} : vector<8x1x4xf32> -> vector<8x1x4xf32>
    %35 = vector.broadcast %34 : vector<8x1x4xf32> to vector<8x8x4xf32>
    %36 = arith.mulf %31, %35 : vector<8x8x4xf32>
    %37 = vector.shape_cast %36 : vector<8x8x4xf32> to vector<64x4xf32>
    %c0_27 = arith.constant 0 : index
    %c0_28 = arith.constant 0 : index
    %38 = vector.load %arg13[%c0_27, %c0_28] : memref<4x32xf32, #tpu.memory_space<vmem>>, vector<4x32xf32>
    %cst_29 = arith.constant dense<0.000000e+00> : vector<64x32xf32>
    %39 = tpu.matmul %37, %38, %cst_29 {dimension_numbers = #tpu.dot_dimension_numbers<[1], [0], [0], [1], [0, 0, 1, 1], [], []>} : vector<64x4xf32>, vector<4x32xf32>, vector<64x32xf32> -> vector<64x32xf32>
    %40 = arith.mulf %39, %19 : vector<64x32xf32>
    %41 = vector.shape_cast %40 : vector<64x32xf32> to vector<8x8x32xf32>
    %cst_30 = arith.constant dense<0.000000e+00> : vector<8x32xf32>
    %42 = vector.multi_reduction <add>, %41, %cst_30 [1] : vector<8x8x32xf32> to vector<8x32xf32>
    %43 = vector.shape_cast %42 : vector<8x32xf32> to vector<8x1x32xf32>
    %44 = vector.shape_cast %43 : vector<8x1x32xf32> to vector<8x32xf32>
    %45 = vector.broadcast %7 : vector<1x32xf32> to vector<8x32xf32>
    %46 = arith.addf %45, %44 : vector<8x32xf32>
    %c0_31 = arith.constant 0 : index
    %c0_32 = arith.constant 0 : index
    %47 = vector.load %arg10[%c0_31, %c0_32] : memref<32x32xf32, #tpu.memory_space<vmem>>, vector<32x32xf32>
    %cst_33 = arith.constant dense<0.000000e+00> : vector<8x32xf32>
    %48 = tpu.matmul %46, %47, %cst_33 {dimension_numbers = #tpu.dot_dimension_numbers<[1], [0], [0], [1], [0, 0, 1, 1], [], []>} : vector<8x32xf32>, vector<32x32xf32>, vector<8x32xf32> -> vector<8x32xf32>
    %c0_34 = arith.constant 0 : index
    %c0_35 = arith.constant 0 : index
    %49 = vector.load %arg11[%c0_34, %c0_35] : memref<1x32xf32, #tpu.memory_space<vmem>>, vector<1x32xf32>
    %50 = vector.broadcast %49 : vector<1x32xf32> to vector<8x32xf32>
    %51 = arith.addf %48, %50 : vector<8x32xf32>
    %cst_36 = arith.constant 0.000000e+00 : f32
    %52 = vector.broadcast %cst_36 : f32 to vector<8x32xf32>
    %53 = arith.maximumf %51, %52 : vector<8x32xf32>
    %54 = arith.addf %46, %53 : vector<8x32xf32>
    %c0_37 = arith.constant 0 : index
    %c0_38 = arith.constant 0 : index
    %55 = vector.load %arg14[%c0_37, %c0_38] : memref<8x32xf32, #tpu.memory_space<vmem>>, vector<8x32xf32>
    tpu.vector_store %arg14[%c0_37, %c0_38], %54 {strides = array<i32>} : memref<8x32xf32, #tpu.memory_space<vmem>>, vector<8x32xf32>,
    return
  }
  func.func @transform_0(%arg0: i32) -> (i32, i32, i32) {
    %c0_i32 = arith.constant 0 : i32
    %c0_i32_0 = arith.constant 0 : i32
    %c0_i32_1 = arith.constant 0 : i32
    return %arg0, %c0_i32, %c0_i32_0 : i32, i32, i32
  }
  func.func @transform_1(%arg0: i32) -> (i32, i32, i32) {
    %c0_i32 = arith.constant 0 : i32
    %c0_i32_0 = arith.constant 0 : i32
    %c0_i32_1 = arith.constant 0 : i32
    return %arg0, %c0_i32, %c0_i32_0 : i32, i32, i32
  }
  func.func @transform_2(%arg0: i32) -> (i32, i32) {
    %c0_i32 = arith.constant 0 : i32
    %c0_i32_0 = arith.constant 0 : i32
    %c0_i32_1 = arith.constant 0 : i32
    return %c0_i32, %c0_i32_0 : i32, i32
  }
  func.func @transform_3(%arg0: i32) -> (i32, i32) {
    %c0_i32 = arith.constant 0 : i32
    %c0_i32_0 = arith.constant 0 : i32
    %c0_i32_1 = arith.constant 0 : i32
    return %c0_i32, %c0_i32_0 : i32, i32
  }
  func.func @transform_4(%arg0: i32) -> (i32, i32) {
    %c0_i32 = arith.constant 0 : i32
    %c0_i32_0 = arith.constant 0 : i32
    %c0_i32_1 = arith.constant 0 : i32
    return %c0_i32, %c0_i32_0 : i32, i32
  }
  func.func @transform_5(%arg0: i32) -> (i32, i32) {
    %c0_i32 = arith.constant 0 : i32
    %c0_i32_0 = arith.constant 0 : i32
    %c0_i32_1 = arith.constant 0 : i32
    return %c0_i32, %c0_i32_0 : i32, i32
  }
  func.func @transform_6(%arg0: i32) -> (i32, i32) {
    %c0_i32 = arith.constant 0 : i32
    %c0_i32_0 = arith.constant 0 : i32
    %c0_i32_1 = arith.constant 0 : i32
    return %c0_i32, %c0_i32_0 : i32, i32
  }
  func.func @transform_7(%arg0: i32) -> (i32, i32) {
    %c0_i32 = arith.constant 0 : i32
    %c0_i32_0 = arith.constant 0 : i32
    %c0_i32_1 = arith.constant 0 : i32
    return %c0_i32, %c0_i32_0 : i32, i32
  }
  func.func @transform_8(%arg0: i32) -> (i32, i32) {
    %c0_i32 = arith.constant 0 : i32
    %c0_i32_0 = arith.constant 0 : i32
    %c0_i32_1 = arith.constant 0 : i32
    return %c0_i32, %c0_i32_0 : i32, i32
  }
  func.func @transform_9(%arg0: i32) -> (i32, i32) {
    %c0_i32 = arith.constant 0 : i32
    %c0_i32_0 = arith.constant 0 : i32
    %c0_i32_1 = arith.constant 0 : i32
    return %c0_i32, %c0_i32_0 : i32, i32
  }
  func.func @transform_10(%arg0: i32) -> (i32, i32) {
    %c0_i32 = arith.constant 0 : i32
    %c0_i32_0 = arith.constant 0 : i32
    %c0_i32_1 = arith.constant 0 : i32
    return %c0_i32, %c0_i32_0 : i32, i32
  }
  func.func @transform_11(%arg0: i32) -> (i32, i32) {
    %c0_i32 = arith.constant 0 : i32
    %c0_i32_0 = arith.constant 0 : i32
    %c0_i32_1 = arith.constant 0 : i32
    return %c0_i32, %c0_i32_0 : i32, i32
  }
  func.func @transform_12(%arg0: i32) -> (i32, i32) {
    %c0_i32 = arith.constant 0 : i32
    %c0_i32_0 = arith.constant 0 : i32
    %c0_i32_1 = arith.constant 0 : i32
    return %c0_i32, %c0_i32_0 : i32, i32
  }
  func.func @transform_13(%arg0: i32) -> (i32, i32) {
    %c0_i32 = arith.constant 0 : i32
    %c0_i32_0 = arith.constant 0 : i32
    return %arg0, %c0_i32 : i32, i32
  }
}

</mosaic_0001>

<llo_original>
// kernel: tpu_custom_call.1
$region0: #{tpu_custom_call.1}
  #allocation0 [shape = 'u32[]', space=smem, size = 0x4, offset = 0x4, fixed_abs, tag = 'smem constant byte address 0x4 - core index']
  #allocation1 [shape = 'u32[144,128]{1,0:T(1,128)}', space=vmem, size = 0x12000, scoped, tag = 'internal scratch']
  %s0 = inlined_call_operand.vmem [shape: f32[16,8,32], index: 0, kind: input, shape index: {}]
  %s1 = inlined_call_operand.vmem [shape: f32[16,8,1], index: 1, kind: input, shape index: {}]
  %s2 = inlined_call_operand.vmem [shape: f32[1,32], index: 2, kind: input, shape index: {}]
  %s3 = inlined_call_operand.vmem [shape: f32[32,32], index: 3, kind: input, shape index: {}]
  %s4 = inlined_call_operand.vmem [shape: f32[1,32], index: 4, kind: input, shape index: {}]
  %s5 = inlined_call_operand.hbm [shape: f32[32,32], index: 5, kind: input, shape index: {}]
  %s6 = inlined_call_operand.vmem [shape: f32[1,32], index: 6, kind: input, shape index: {}]
  %s7 = inlined_call_operand.hbm [shape: f32[32,32], index: 7, kind: input, shape index: {}]
  %s8 = inlined_call_operand.vmem [shape: f32[1,32], index: 8, kind: input, shape index: {}]
  %s9 = inlined_call_operand.hbm [shape: f32[32,32], index: 9, kind: input, shape index: {}]
  %s10 = inlined_call_operand.vmem [shape: f32[1,32], index: 10, kind: input, shape index: {}]
  %s11 = inlined_call_operand.vmem [shape: f32[32,4], index: 11, kind: input, shape index: {}]
  %s12 = inlined_call_operand.vmem [shape: f32[4,32], index: 12, kind: input, shape index: {}]
  %s13 = inlined_call_operand.hbm [shape: f32[16,32], index: 13, kind: output, shape index: {}]
  %s14 = sld [smem:[#allocation0]]
  $region97: #{tpu_custom_call.1} parent=0
    _
  %s16 = ssub.s32 1, %s14
  %s17 = scalar_select 0, %s16, %s14
  $region1: #{tpu_custom_call.1} parent=0
    #allocation2 [shape = 'u8[16384]{0}', space=vmem, size = 0x4000, scoped, tag = 'input window, operand 5, single buffered']
    #allocation3 [shape = 's32[2]{0}', space=sflag, size = 0x8, scoped, tag = 'scoped memory for tpu_custom_call.1']
    #allocation4 [shape = 's32[2]{0}', space=sflag, size = 0x8, scoped, tag = 'scoped memory for tpu_custom_call.1']
    #allocation5 [shape = 'u8[16384]{0}', space=vmem, size = 0x4000, scoped, tag = 'input window, operand 7, single buffered']
    #allocation6 [shape = 's32[1]{0}', space=sflag, size = 0x4, scoped, tag = 'scoped memory for tpu_custom_call.1']
    #allocation7 [shape = 'u8[16384]{0}', space=vmem, size = 0x4000, scoped, tag = 'input window, operand 9, single buffered']
    #allocation8 [shape = 'u8[8192]{0}', space=vmem, size = 0x2000, scoped, tag = 'output window, operand 0']
    %18 = vsyncpa [#allocation3], 0
    %19 = vsyncpa [#allocation6], 0
    %20 = vsyncpa [#allocation4], 0
    %s21 = scalar_lea.sflag [#allocation4], 1
    %22 = vsyncpa %s21, 0
    loop: start=0, step=1, limit=4
    $region2: #{tpu_custom_call.1} parent=1 // loop_pre_header
      _
    $region3: #{tpu_custom_call.1} parent=1 // loop_header
      %s24 = sphi 0, %s28
      %p25 = scmp.ge.s32.totalorder %s24, 4
      %s34 = sphi 0, %s36
      %s37 = sphi 0, %s34
      %s38 = sphi 0, %s37
      %s54 = sphi 0, %s38
      %s60 = sphi 0, %s62
      %s63 = sphi 0, %s60
      %s64 = sphi 0, %s63
      %s80 = sphi 0, %s64
      %s84 = sphi 0, %s84
      %s86 = sphi 0, %s84
      %s87 = sphi 0, %s86
      %s101 = sphi 0, %s87
      %s105 = sphi 0, %s105
      %s107 = sphi 0, %s105
      %s108 = sphi 0, %s107
      %s122 = sphi 0, %s108
      %s126 = sphi 0, %s126
      %s128 = sphi 0, %s126
      %s129 = sphi 0, %s128
      %s143 = sphi 0, %s129
      %s147 = sphi 0, %s147
      %s149 = sphi 0, %s147
      %s150 = sphi 0, %s149
      %s164 = sphi 0, %s150
      %s168 = sphi 0, %s168
      %s170 = sphi 0, %s168
      %s171 = sphi 0, %s170
      %s185 = sphi 0, %s171
      %s189 = sphi 0, %s189
      %s191 = sphi 0, %s189
      %s192 = sphi 0, %s191
      %s206 = sphi 0, %s192
      %s210 = sphi 0, %s210
      %s212 = sphi 0, %s210
      %s213 = sphi 0, %s212
      %s227 = sphi 0, %s213
      %s231 = sphi 0, %s231
      %s233 = sphi 0, %s231
      %s234 = sphi 0, %s233
      %s248 = sphi 0, %s234
      %s252 = sphi 0, %s252
      %s254 = sphi 0, %s252
      %s255 = sphi 0, %s254
      %s269 = sphi 0, %s255
      %s273 = sphi 0, %s273
      %s275 = sphi 0, %s273
      %s276 = sphi 0, %s275
      %s290 = sphi 0, %s276
      %s294 = sphi 0, %s294
      %s296 = sphi 0, %s294
      %s297 = sphi 0, %s296
      %s311 = sphi 0, %s297
      %s317 = sphi 0, %s319
      %s320 = sphi 0, %s317
      %s321 = sphi 0, %s320
      %s337 = sphi 0, %s321
    $region4: #{tpu_custom_call.1} parent=1 // loop_header_branch
      %27 = sbr.rel (%p25) target = $region8
    $region5: #{tpu_custom_call.1} parent=1 // loop_body
      %s29 = ssub.s32 %s24, 1
      %s30 = ssub.s32 %s24, 2
      %s31 = sadd.s32 %s24, 1
      %s32 = ssub.s32 %s24, %s31
      %p33 = scmp.eq.s32.totalorder %s32, 0
      %s35 = sadd.s32 %s34, 1
      %s36 = scalar_select %p33, %s34, %s35
      %p39 = pneg %p33
      %p40 = scmp.eq.s32.totalorder %s24, 1
      %p41 = por %p39, %p40
      %p42 = scmp.ne.s32.totalorder %s34, %s37
      %p43 = scmp.eq.s32.totalorder %s24, 0
      %p44 = por %p42, %p43
      %p45 = scmp.ne.s32.totalorder %s34, %s37
      %p46 = scmp.eq.s32.totalorder %s29, 1
      %p47 = por %p45, %p46
      %p48 = scmp.ne.s32.totalorder %s37, %s38
      %p49 = scmp.eq.s32.totalorder %s29, 0
      %p50 = por %p48, %p49
      %p51 = scmp.ne.s32.totalorder %s37, %s38
      %p52 = scmp.eq.s32.totalorder %s30, 1
      %p53 = por %p51, %p52
      %p55 = scmp.ne.s32.totalorder %s38, %s54
      %p56 = scmp.eq.s32.totalorder %s30, 0
      %p57 = por %p55, %p56
      %s58 = ssub.s32 %s24, %s31
      %p59 = scmp.eq.s32.totalorder %s58, 0
      %s61 = sadd.s32 %s60, 1
      %s62 = scalar_select %p59, %s60, %s61
      %p65 = pneg %p59
      %p66 = scmp.eq.s32.totalorder %s24, 1
      %p67 = por %p65, %p66
      %p68 = scmp.ne.s32.totalorder %s60, %s63
      %p69 = scmp.eq.s32.totalorder %s24, 0
      %p70 = por %p68, %p69
      %p71 = scmp.ne.s32.totalorder %s60, %s63
      %p72 = scmp.eq.s32.totalorder %s29, 1
      %p73 = por %p71, %p72
      %p74 = scmp.ne.s32.totalorder %s63, %s64
      %p75 = scmp.eq.s32.totalorder %s29, 0
      %p76 = por %p74, %p75
      %p77 = scmp.ne.s32.totalorder %s63, %s64
      %p78 = scmp.eq.s32.totalorder %s30, 1
      %p79 = por %p77, %p78
      %p81 = scmp.ne.s32.totalorder %s64, %s80
      %p82 = scmp.eq.s32.totalorder %s30, 0
      %p83 = por %p81, %p82
      %s85 = sadd.s32 %s84, 1
      %p88 = scmp.eq.s32.totalorder %s24, 1
      %p89 = scmp.ne.s32.totalorder %s84, %s86
      %p90 = scmp.eq.s32.totalorder %s24, 0
      %p91 = por %p89, %p90
      %p92 = scmp.ne.s32.totalorder %s84, %s86
      %p93 = scmp.eq.s32.totalorder %s29, 1
      %p94 = por %p92, %p93
      %p95 = scmp.ne.s32.totalorder %s86, %s87
      %p96 = scmp.eq.s32.totalorder %s29, 0
      %p97 = por %p95, %p96
      %p98 = scmp.ne.s32.totalorder %s86, %s87
      %p99 = scmp.eq.s32.totalorder %s30, 1
      %p100 = por %p98, %p99
      %p102 = scmp.ne.s32.totalorder %s87, %s101
      %p103 = scmp.eq.s32.totalorder %s30, 0
      %p104 = por %p102, %p103
      %s106 = sadd.s32 %s105, 1
      %p109 = scmp.eq.s32.totalorder %s24, 1
      %p110 = scmp.ne.s32.totalorder %s105, %s107
      %p111 = scmp.eq.s32.totalorder %s24, 0
      %p112 = por %p110, %p111
      %p113 = scmp.ne.s32.totalorder %s105, %s107
      %p114 = scmp.eq.s32.totalorder %s29, 1
      %p115 = por %p113, %p114
      %p116 = scmp.ne.s32.totalorder %s107, %s108
      %p117 = scmp.eq.s32.totalorder %s29, 0
      %p118 = por %p116, %p117
      %p119 = scmp.ne.s32.totalorder %s107, %s108
      %p120 = scmp.eq.s32.totalorder %s30, 1
      %p121 = por %p119, %p120
      %p123 = scmp.ne.s32.totalorder %s108, %s122
      %p124 = scmp.eq.s32.totalorder %s30, 0
      %p125 = por %p123, %p124
      %s127 = sadd.s32 %s126, 1
      %p130 = scmp.eq.s32.totalorder %s24, 1
      %p131 = scmp.ne.s32.totalorder %s126, %s128
      %p132 = scmp.eq.s32.totalorder %s24, 0
      %p133 = por %p131, %p132
      %p134 = scmp.ne.s32.totalorder %s126, %s128
      %p135 = scmp.eq.s32.totalorder %s29, 1
      %p136 = por %p134, %p135
      %p137 = scmp.ne.s32.totalorder %s128, %s129
      %p138 = scmp.eq.s32.totalorder %s29, 0
      %p139 = por %p137, %p138
      %p140 = scmp.ne.s32.totalorder %s128, %s129
      %p141 = scmp.eq.s32.totalorder %s30, 1
      %p142 = por %p140, %p141
      %p144 = scmp.ne.s32.totalorder %s129, %s143
      %p145 = scmp.eq.s32.totalorder %s30, 0
      %p146 = por %p144, %p145
      %s148 = sadd.s32 %s147, 1
      %p151 = scmp.eq.s32.totalorder %s24, 1
      %p152 = scmp.ne.s32.totalorder %s147, %s149
      %p153 = scmp.eq.s32.totalorder %s24, 0
      %p154 = por %p152, %p153
      %p155 = scmp.ne.s32.totalorder %s147, %s149
      %p156 = scmp.eq.s32.totalorder %s29, 1
      %p157 = por %p155, %p156
      %p158 = scmp.ne.s32.totalorder %s149, %s150
      %p159 = scmp.eq.s32.totalorder %s29, 0
      %p160 = por %p158, %p159
      %p161 = scmp.ne.s32.totalorder %s149, %s150
      %p162 = scmp.eq.s32.totalorder %s30, 1
      %p163 = por %p161, %p162
      %p165 = scmp.ne.s32.totalorder %s150, %s164
      %p166 = scmp.eq.s32.totalorder %s30, 0
      %p167 = por %p165, %p166
      %s169 = sadd.s32 %s168, 1
      %p172 = scmp.eq.s32.totalorder %s24, 1
      %p173 = scmp.ne.s32.totalorder %s168, %s170
      %p174 = scmp.eq.s32.totalorder %s24, 0
      %p175 = por %p173, %p174
      %p176 = scmp.ne.s32.totalorder %s168, %s170
      %p177 = scmp.eq.s32.totalorder %s29, 1
      %p178 = por %p176, %p177
      %p179 = scmp.ne.s32.totalorder %s170, %s171
      %p180 = scmp.eq.s32.totalorder %s29, 0
      %p181 = por %p179, %p180
      %p182 = scmp.ne.s32.totalorder %s170, %s171
      %p183 = scmp.eq.s32.totalorder %s30, 1
      %p184 = por %p182, %p183
      %p186 = scmp.ne.s32.totalorder %s171, %s185
      %p187 = scmp.eq.s32.totalorder %s30, 0
      %p188 = por %p186, %p187
      %s190 = sadd.s32 %s189, 1
      %p193 = scmp.eq.s32.totalorder %s24, 1
      %p194 = scmp.ne.s32.totalorder %s189, %s191
      %p195 = scmp.eq.s32.totalorder %s24, 0
      %p196 = por %p194, %p195
      %p197 = scmp.ne.s32.totalorder %s189, %s191
      %p198 = scmp.eq.s32.totalorder %s29, 1
      %p199 = por %p197, %p198
      %p200 = scmp.ne.s32.totalorder %s191, %s192
      %p201 = scmp.eq.s32.totalorder %s29, 0
      %p202 = por %p200, %p201
      %p203 = scmp.ne.s32.totalorder %s191, %s192
      %p204 = scmp.eq.s32.totalorder %s30, 1
      %p205 = por %p203, %p204
      %p207 = scmp.ne.s32.totalorder %s192, %s206
      %p208 = scmp.eq.s32.totalorder %s30, 0
      %p209 = por %p207, %p208
      %s211 = sadd.s32 %s210, 1
      %p214 = scmp.eq.s32.totalorder %s24, 1
      %p215 = scmp.ne.s32.totalorder %s210, %s212
      %p216 = scmp.eq.s32.totalorder %s24, 0
      %p217 = por %p215, %p216
      %p218 = scmp.ne.s32.totalorder %s210, %s212
      %p219 = scmp.eq.s32.totalorder %s29, 1
      %p220 = por %p218, %p219
      %p221 = scmp.ne.s32.totalorder %s212, %s213
      %p222 = scmp.eq.s32.totalorder %s29, 0
      %p223 = por %p221, %p222
      %p224 = scmp.ne.s32.totalorder %s212, %s213
      %p225 = scmp.eq.s32.totalorder %s30, 1
      %p226 = por %p224, %p225
      %p228 = scmp.ne.s32.totalorder %s213, %s227
      %p229 = scmp.eq.s32.totalorder %s30, 0
      %p230 = por %p228, %p229
      %s232 = sadd.s32 %s231, 1
      %p235 = scmp.eq.s32.totalorder %s24, 1
      %p236 = scmp.ne.s32.totalorder %s231, %s233
      %p237 = scmp.eq.s32.totalorder %s24, 0
      %p238 = por %p236, %p237
      %p239 = scmp.ne.s32.totalorder %s231, %s233
      %p240 = scmp.eq.s32.totalorder %s29, 1
      %p241 = por %p239, %p240
      %p242 = scmp.ne.s32.totalorder %s233, %s234
      %p243 = scmp.eq.s32.totalorder %s29, 0
      %p244 = por %p242, %p243
      %p245 = scmp.ne.s32.totalorder %s233, %s234
      %p246 = scmp.eq.s32.totalorder %s30, 1
      %p247 = por %p245, %p246
      %p249 = scmp.ne.s32.totalorder %s234, %s248
      %p250 = scmp.eq.s32.totalorder %s30, 0
      %p251 = por %p249, %p250
      %s253 = sadd.s32 %s252, 1
      %p256 = scmp.eq.s32.totalorder %s24, 1
      %p257 = scmp.ne.s32.totalorder %s252, %s254
      %p258 = scmp.eq.s32.totalorder %s24, 0
      %p259 = por %p257, %p258
      %p260 = scmp.ne.s32.totalorder %s252, %s254
      %p261 = scmp.eq.s32.totalorder %s29, 1
      %p262 = por %p260, %p261
      %p263 = scmp.ne.s32.totalorder %s254, %s255
      %p264 = scmp.eq.s32.totalorder %s29, 0
      %p265 = por %p263, %p264
      %p266 = scmp.ne.s32.totalorder %s254, %s255
      %p267 = scmp.eq.s32.totalorder %s30, 1
      %p268 = por %p266, %p267
      %p270 = scmp.ne.s32.totalorder %s255, %s269
      %p271 = scmp.eq.s32.totalorder %s30, 0
      %p272 = por %p270, %p271
      %s274 = sadd.s32 %s273, 1
      %p277 = scmp.eq.s32.totalorder %s24, 1
      %p278 = scmp.ne.s32.totalorder %s273, %s275
      %p279 = scmp.eq.s32.totalorder %s24, 0
      %p280 = por %p278, %p279
      %p281 = scmp.ne.s32.totalorder %s273, %s275
      %p282 = scmp.eq.s32.totalorder %s29, 1
      %p283 = por %p281, %p282
      %p284 = scmp.ne.s32.totalorder %s275, %s276
      %p285 = scmp.eq.s32.totalorder %s29, 0
      %p286 = por %p284, %p285
      %p287 = scmp.ne.s32.totalorder %s275, %s276
      %p288 = scmp.eq.s32.totalorder %s30, 1
      %p289 = por %p287, %p288
      %p291 = scmp.ne.s32.totalorder %s276, %s290
      %p292 = scmp.eq.s32.totalorder %s30, 0
      %p293 = por %p291, %p292
      %s295 = sadd.s32 %s294, 1
      %p298 = scmp.eq.s32.totalorder %s24, 1
      %p299 = scmp.ne.s32.totalorder %s294, %s296
      %p300 = scmp.eq.s32.totalorder %s24, 0
      %p301 = por %p299, %p300
      %p302 = scmp.ne.s32.totalorder %s294, %s296
      %p303 = scmp.eq.s32.totalorder %s29, 1
      %p304 = por %p302, %p303
      %p305 = scmp.ne.s32.totalorder %s296, %s297
      %p306 = scmp.eq.s32.totalorder %s29, 0
      %p307 = por %p305, %p306
      %p308 = scmp.ne.s32.totalorder %s296, %s297
      %p309 = scmp.eq.s32.totalorder %s30, 1
      %p310 = por %p308, %p309
      %p312 = scmp.ne.s32.totalorder %s297, %s311
      %p313 = scmp.eq.s32.totalorder %s30, 0
      %p314 = por %p312, %p313
      %s315 = ssub.s32 %s24, %s31
      %p316 = scmp.eq.s32.totalorder %s315, 0
      %s318 = sadd.s32 %s317, 1
      %s319 = scalar_select %p316, %s317, %s318
      %p322 = pneg %p316
      %p323 = scmp.eq.s32.totalorder %s24, 1
      %p324 = por %p322, %p323
      %p325 = scmp.ne.s32.totalorder %s317, %s320
      %p326 = scmp.eq.s32.totalorder %s24, 0
      %p327 = por %p325, %p326
      %p328 = scmp.ne.s32.totalorder %s317, %s320
      %p329 = scmp.eq.s32.totalorder %s29, 1
      %p330 = por %p328, %p329
      %p331 = scmp.ne.s32.totalorder %s320, %s321
      %p332 = scmp.eq.s32.totalorder %s29, 0
      %p333 = por %p331, %p332
      %p334 = scmp.ne.s32.totalorder %s320, %s321
      %p335 = scmp.eq.s32.totalorder %s30, 1
      %p336 = por %p334, %p335
      %p338 = scmp.ne.s32.totalorder %s321, %s337
      %p339 = scmp.eq.s32.totalorder %s30, 0
      %p340 = por %p338, %p339
      %p341 = scmp.le.s32.totalorder 1, %s24
      %p342 = scmp.lt.s32.totalorder %s24, 3
      %p343 = pnand %p341, %p342
      %p344 = pneg %p343
      // Predicated region
      $region9: #{tpu_custom_call.1} parent=5 // pred_check
        _
      $region10: #{tpu_custom_call.1} parent=5 // pred_check_branch
        %346 = sbr.rel (%p343) target = $region12
      $region11: #{tpu_custom_call.1} parent=5 // pred_region
        %s347 = ssub.s32 %s24, 1
        // Predicated region
        $region13: #{tpu_custom_call.1} parent=11 // pred_check
          %p348 = pneg %p97
        $region14: #{tpu_custom_call.1} parent=11 // pred_check_branch
          %350 = sbr.rel (%p348) target = $region16
        $region15: #{tpu_custom_call.1} parent=11 // pred_region
          _
        $region16: #{tpu_custom_call.1} parent=11 // pred_fallthru
          _
        // Predicated region
        $region17: #{tpu_custom_call.1} parent=11 // pred_check
          %p351 = pneg %p118
        $region18: #{tpu_custom_call.1} parent=11 // pred_check_branch
          %353 = sbr.rel (%p351) target = $region20
        $region19: #{tpu_custom_call.1} parent=11 // pred_region
          _
        $region20: #{tpu_custom_call.1} parent=11 // pred_fallthru
          _
        // Predicated region
        $region21: #{tpu_custom_call.1} parent=11 // pred_check
          %p354 = pneg %p139
        $region22: #{tpu_custom_call.1} parent=11 // pred_check_branch
          %356 = sbr.rel (%p354) target = $region24
        $region23: #{tpu_custom_call.1} parent=11 // pred_region
          _
        $region24: #{tpu_custom_call.1} parent=11 // pred_fallthru
          _
        // Predicated region
        $region25: #{tpu_custom_call.1} parent=11 // pred_check
          %p357 = pneg %p160
        $region26: #{tpu_custom_call.1} parent=11 // pred_check_branch
          %359 = sbr.rel (%p357) target = $region28
        $region27: #{tpu_custom_call.1} parent=11 // pred_region
          %s361 = ssub.s32 512, 512
          %362 = vsyncadd [#allocation3], %s361
          %s363 = sshll.u32 [#allocation2], 4
          %s364 = int_to_ptr.vmem [resolvable:$true] %s363
          %369 = dma.hbm_to_vmem [thread:$0]  %s5, 512, %s364, [#allocation3], 128, 128, 8
        $region28: #{tpu_custom_call.1} parent=11 // pred_fallthru
          _
        // Predicated region
        $region29: #{tpu_custom_call.1} parent=11 // pred_check
          %p370 = pneg %p181
        $region30: #{tpu_custom_call.1} parent=11 // pred_check_branch
          %372 = sbr.rel (%p370) target = $region32
        $region31: #{tpu_custom_call.1} parent=11 // pred_region
          _
        $region32: #{tpu_custom_call.1} parent=11 // pred_fallthru
          _
        // Predicated region
        $region33: #{tpu_custom_call.1} parent=11 // pred_check
          %p373 = pneg %p202
        $region34: #{tpu_custom_call.1} parent=11 // pred_check_branch
          %375 = sbr.rel (%p373) target = $region36
        $region35: #{tpu_custom_call.1} parent=11 // pred_region
          %s377 = ssub.s32 512, 512
          %378 = vsyncadd [#allocation6], %s377
          %s379 = sshll.u32 [#allocation5], 4
          %s380 = int_to_ptr.vmem [resolvable:$true] %s379
          %385 = dma.hbm_to_vmem [thread:$0]  %s7, 512, %s380, [#allocation6], 128, 128, 8
        $region36: #{tpu_custom_call.1} parent=11 // pred_fallthru
          _
        // Predicated region
        $region37: #{tpu_custom_call.1} parent=11 // pred_check
          %p386 = pneg %p223
        $region38: #{tpu_custom_call.1} parent=11 // pred_check_branch
          %388 = sbr.rel (%p386) target = $region40
        $region39: #{tpu_custom_call.1} parent=11 // pred_region
          _
        $region40: #{tpu_custom_call.1} parent=11 // pred_fallthru
          _
        // Predicated region
        $region41: #{tpu_custom_call.1} parent=11 // pred_check
          %p389 = pneg %p244
        $region42: #{tpu_custom_call.1} parent=11 // pred_check_branch
          %391 = sbr.rel (%p389) target = $region44
        $region43: #{tpu_custom_call.1} parent=11 // pred_region
          %s393 = ssub.s32 512, 512
          %394 = vsyncadd [#allocation6], %s393
          %s395 = sshll.u32 [#allocation7], 4
          %s396 = int_to_ptr.vmem [resolvable:$true] %s395
          %401 = dma.hbm_to_vmem [thread:$0]  %s9, 512, %s396, [#allocation6], 128, 128, 8
        $region44: #{tpu_custom_call.1} parent=11 // pred_fallthru
          _
        // Predicated region
        $region45: #{tpu_custom_call.1} parent=11 // pred_check
          %p402 = pneg %p265
        $region46: #{tpu_custom_call.1} parent=11 // pred_check_branch
          %404 = sbr.rel (%p402) target = $region48
        $region47: #{tpu_custom_call.1} parent=11 // pred_region
          _
        $region48: #{tpu_custom_call.1} parent=11 // pred_fallthru
          _
        // Predicated region
        $region49: #{tpu_custom_call.1} parent=11 // pred_check
          %p405 = pneg %p286
        $region50: #{tpu_custom_call.1} parent=11 // pred_check_branch
          %407 = sbr.rel (%p405) target = $region52
        $region51: #{tpu_custom_call.1} parent=11 // pred_region
          _
        $region52: #{tpu_custom_call.1} parent=11 // pred_fallthru
          _
        // Predicated region
        $region53: #{tpu_custom_call.1} parent=11 // pred_check
          %p408 = pneg %p307
        $region54: #{tpu_custom_call.1} parent=11 // pred_check_branch
          %410 = sbr.rel (%p408) target = $region56
        $region55: #{tpu_custom_call.1} parent=11 // pred_region
          _
        $region56: #{tpu_custom_call.1} parent=11 // pred_fallthru
          _
      $region12: #{tpu_custom_call.1} parent=5 // pred_fallthru
        _
      %p411 = scmp.lt.s32.totalorder %s24, 2
      // Predicated region
      $region57: #{tpu_custom_call.1} parent=5 // pred_check
        %p412 = pneg %p411
      $region58: #{tpu_custom_call.1} parent=5 // pred_check_branch
        %414 = sbr.rel (%p412) target = $region60
      $region59: #{tpu_custom_call.1} parent=5 // pred_region
        // Predicated region
        $region61: #{tpu_custom_call.1} parent=59 // pred_check
          %p415 = pneg %p44
        $region62: #{tpu_custom_call.1} parent=59 // pred_check_branch
          %417 = sbr.rel (%p415) target = $region64
        $region63: #{tpu_custom_call.1} parent=59 // pred_region
          %s418 = smul.u32 8, %s24
          %p419 = scmp.lt.s32.totalorder %s418, 15
          %s420 = scalar_select %p419, %s418, 15
          %s421 = smul.addr %s420, 8
          %s422 = scalar_lea.vmem %s0, %s421
          %s423 = smul.u32 8, %s24
        $region64: #{tpu_custom_call.1} parent=59 // pred_fallthru
          _
        // Predicated region
        $region65: #{tpu_custom_call.1} parent=59 // pred_check
          %p424 = pneg %p70
        $region66: #{tpu_custom_call.1} parent=59 // pred_check_branch
          %426 = sbr.rel (%p424) target = $region68
        $region67: #{tpu_custom_call.1} parent=59 // pred_region
          %s427 = smul.u32 8, %s24
          %p428 = scmp.lt.s32.totalorder %s427, 15
          %s429 = scalar_select %p428, %s427, 15
          %s430 = smul.addr %s429, 8
          %s431 = scalar_lea.vmem %s1, %s430
          %s432 = smul.u32 8, %s24
        $region68: #{tpu_custom_call.1} parent=59 // pred_fallthru
          _
      $region60: #{tpu_custom_call.1} parent=5 // pred_fallthru
        _
      %p433 = scmp.le.s32.totalorder 1, %s24
      %p434 = scmp.lt.s32.totalorder %s24, 3
      %p435 = pnand %p433, %p434
      %p436 = pneg %p435
      // Predicated region
      $region69: #{tpu_custom_call.1} parent=5 // pred_check
        _
      $region70: #{tpu_custom_call.1} parent=5 // pred_check_branch
        %438 = sbr.rel (%p435) target = $region72
      $region71: #{tpu_custom_call.1} parent=5 // pred_region
        %s439 = ssub.s32 %s24, 1
        // Predicated region
        $region73: #{tpu_custom_call.1} parent=71 // pred_check
          %p440 = pneg %p160
        $region74: #{tpu_custom_call.1} parent=71 // pred_check_branch
          %442 = sbr.rel (%p440) target = $region76
        $region75: #{tpu_custom_call.1} parent=71 // pred_region
          %443 = dma.done [#allocation3], 512
        $region76: #{tpu_custom_call.1} parent=71 // pred_fallthru
          _
        // Predicated region
        $region77: #{tpu_custom_call.1} parent=71 // pred_check
          %p444 = pneg %p202
        $region78: #{tpu_custom_call.1} parent=71 // pred_check_branch
          %446 = sbr.rel (%p444) target = $region80
        $region79: #{tpu_custom_call.1} parent=71 // pred_region
          %447 = dma.done [#allocation6], 512
        $region80: #{tpu_custom_call.1} parent=71 // pred_fallthru
          _
        // Predicated region
        $region81: #{tpu_custom_call.1} parent=71 // pred_check
          %p448 = pneg %p244
        $region82: #{tpu_custom_call.1} parent=71 // pred_check_branch
          %450 = sbr.rel (%p448) target = $region84
        $region83: #{tpu_custom_call.1} parent=71 // pred_region
          %451 = dma.done [#allocation6], 512
        $region84: #{tpu_custom_call.1} parent=71 // pred_fallthru
          _
        %s452 = smul.u32 8, %s29
        %p453 = scmp.lt.s32.totalorder %s452, 15
        %s454 = scalar_select %p453, %s452, 15
        %s455 = smul.addr %s454, 8
        %s456 = scalar_lea.vmem %s0, %s455
        %p457 = pneg %p50
        %p458 = pneg %p47
        %s459 = smul.u32 8, %s29
        %p460 = scmp.lt.s32.totalorder %s459, 15
        %s461 = scalar_select %p460, %s459, 15
        %s462 = smul.addr %s461, 8
        %s463 = scalar_lea.vmem %s1, %s462
        %p464 = pneg %p76
        %p465 = pneg %p73
        %p466 = pneg %p97
        %p467 = pneg %p94
        %p468 = pneg %p118
        %p469 = pneg %p115
        %p470 = pneg %p139
        %p471 = pneg %p136
        %p472 = pneg %p160
        %p473 = pneg %p157
        %p474 = pneg %p181
        %p475 = pneg %p178
        %p476 = pneg %p202
        %p477 = pneg %p199
        %p478 = pneg %p223
        %p479 = pneg %p220
        %p480 = pneg %p244
        %p481 = pneg %p241
        %p482 = pneg %p265
        %p483 = pneg %p262
        %p484 = pneg %p286
        %p485 = pneg %p283
        %p486 = pneg %p307
        %p487 = pneg %p304
        %p488 = pneg %p333
        %p489 = pneg %p330
        %s490 = sand.u32 %s320, 1
        %s491 = scalar_lea.sflag [#allocation4], %s490
        %s492 = sand.u32 %s320, 1
        %s493 = smul.addr %s492, 8
        %s494 = scalar_lea.vmem [#allocation8], %s493
        %s495 = smul.u32 8, %s29
        %p496 = scmp.lt.s32.totalorder %s495, 15
        %s497 = scalar_select %p496, %s495, 15
        %s498 = smul.addr %s497, 8
        %s499 = scalar_lea.vmem %s0, %s498
        %s500 = smul.u32 8, %s29
        %s501 = smul.u32 8, %s29
        %p502 = scmp.lt.s32.totalorder %s501, 15
        %s503 = scalar_select %p502, %s501, 15
        %s504 = smul.addr %s503, 8
        %s505 = scalar_lea.vmem %s1, %s504
        %s506 = smul.u32 8, %s29
        %v507 = vld [vmem:[%s499] sm:$0xff]
        %v508 = vld [vmem:[%s499 + $0x8] sm:$0xff]
        %v509 = vld [vmem:[%s499 + $0x10] sm:$0xff]
        %v510 = vld [vmem:[%s499 + $0x18] sm:$0xff]
        %v511 = vld [vmem:[%s499 + $0x20] sm:$0xff]
        %v512 = vld [vmem:[%s499 + $0x28] sm:$0xff]
        %v513 = vld [vmem:[%s499 + $0x30] sm:$0xff]
        %v514 = vld [vmem:[%s499 + $0x38] sm:$0xff]
        %v515 = vld [vmem:[%s505] sm:$0xff]
        %v516 = vld [vmem:[%s505 + $0x8] sm:$0xff]
        %v517 = vld [vmem:[%s505 + $0x10] sm:$0xff]
        %v518 = vld [vmem:[%s505 + $0x18] sm:$0xff]
        %v519 = vld [vmem:[%s505 + $0x20] sm:$0xff]
        %v520 = vld [vmem:[%s505 + $0x28] sm:$0xff]
        %v521 = vld [vmem:[%s505 + $0x30] sm:$0xff]
        %v522 = vld [vmem:[%s505 + $0x38] sm:$0xff]
        %v523 = vld [vmem:[%s2] sm:$0x1]
        %v524 = vld [vmem:[%s3] sm:$0xff]
        %v525 = vld [vmem:[%s3 + $0x8] sm:$0xff]
        %v526 = vld [vmem:[%s3 + $0x10] sm:$0xff]
        %v527 = vld [vmem:[%s3 + $0x18] sm:$0xff]
        %v528 = vld [vmem:[%s4] sm:$0x1]
        %vm529 = vcmask 261120
        %v531 = vsel %vm529, %v523, 0
        %533 = vmatprep.subr.mxu0 0.0
        %534 = vmatpush1.msra.mxu0 0.0
        %535 = vmatprep.subr.mxu0 0.0
        %536 = vmatpush1.msra.mxu0 0.0
        %537 = vmatprep.subr.mxu0 0.0
        %538 = vmatpush1.msra.mxu0 0.0
        %539 = vmatprep.subr.mxu0 0.0
        %540 = vmatpush1.msra.mxu0 0.0
        %541 = vmatprep.subr.mxu0 0.0
        %542 = vmatpush1.msra.mxu0 0.0
        %543 = vmatprep.subr.mxu0 0.0
        %544 = vmatpush1.msra.mxu0 0.0
        %545 = vmatprep.subr.mxu0 0.0
        %546 = vmatpush1.msra.mxu0 0.0
        %547 = vmatprep.subr.mxu0 0.0
        %548 = vmatpush1.msra.mxu0 0.0
        %549 = vmatprep.subr.mxu0 0.0
        %550 = vmatpush1.msra.mxu0 0.0
        %551 = vmatprep.subr.mxu0 0.0
        %552 = vmatpush1.msra.mxu0 0.0
        %553 = vmatprep.subr.mxu0 0.0
        %554 = vmatpush1.msra.mxu0 0.0
        %555 = vmatprep.subr.mxu0 0.0
        %556 = vmatpush1.msra.mxu0 0.0
        %557 = vmatprep.subr.mxu0 0.0
        %558 = vmatpush1.msra.mxu0 %v527
        %559 = vmatprep.subr.mxu0 0.0
        %560 = vmatpush1.msra.mxu0 %v526
        %561 = vmatprep.subr.mxu0 0.0
        %562 = vmatpush1.msra.mxu0 %v525
        %563 = vmatprep.subr.mxu0 0.0
        %564 = vmatpush1.msra.mxu0 %v524
        %565 = vmatprep.subr.mxu0 0.0
        %566 = vmatpush2.msra.mxu0 0.0
        %567 = vmatprep.subr.mxu0 0.0
        %568 = vmatpush2.msra.mxu0 0.0
        %569 = vmatprep.subr.mxu0 0.0
        %570 = vmatpush2.msra.mxu0 0.0
        %571 = vmatprep.subr.mxu0 0.0
        %572 = vmatpush2.msra.mxu0 0.0
        %573 = vmatprep.subr.mxu0 0.0
        %574 = vmatpush2.msra.mxu0 0.0
        %575 = vmatprep.subr.mxu0 0.0
        %576 = vmatpush2.msra.mxu0 0.0
        %577 = vmatprep.subr.mxu0 0.0
        %578 = vmatpush2.msra.mxu0 0.0
        %579 = vmatprep.subr.mxu0 0.0
        %580 = vmatpush2.msra.mxu0 0.0
        %581 = vmatprep.subr.mxu0 0.0
        %582 = vmatpush2.msra.mxu0 0.0
        %583 = vmatprep.subr.mxu0 0.0
        %584 = vmatpush2.msra.mxu0 0.0
        %585 = vmatprep.subr.mxu0 0.0
        %586 = vmatpush2.msra.mxu0 0.0
        %587 = vmatprep.subr.mxu0 0.0
        %588 = vmatpush2.msra.mxu0 0.0
        %589 = vmatprep.subr.mxu0 0.0
        %590 = vmatpush2.msra.mxu0 0.0
        %591 = vmatprep.subr.mxu0 0.0
        %592 = vmatpush2.msra.mxu0 0.0
        %593 = vmatprep.subr.mxu0 0.0
        %594 = vmatpush2.msra.mxu0 0.0
        %595 = vmatprep.subr.mxu0 0.0
        %596 = vmatpush2.msra.mxu0 0.0
        %597 = vmatprep.mubr.f32.mxu0 0.0
        %598 = vmatmul.mubr.f32.gmra.mxu0 %v531
        %v599 = vpop.f32.mrf.mxu0
        %v600 = vadd.f32 %v528, %v599
        %v601 = vpop.f32.mrf.mxu0
        %602 = vdwg.mxu0
        %v603 = vmul.f32 %v600, 0.17677669
        %v604 = vld [vmem:[#allocation2] sm:$0xff]
        %v605 = vld [vmem:[#allocation2 + $0x8] sm:$0xff]
        %v606 = vld [vmem:[#allocation2 + $0x10] sm:$0xff]
        %v607 = vld [vmem:[#allocation2 + $0x18] sm:$0xff]
        %v608 = vld [vmem:[%s6] sm:$0x1]
        %v610 = vlaneseq
        %v611 = vshrl.u32 %v610, 7
        %v612 = vsub.s32 0, %v611
        %v613 = vrot.slane %v608, %v612
        %v616 = vsel %vm529, %v507, 0
        %v619 = vsel %vm529, %v508, 0
        %v622 = vsel %vm529, %v509, 0
        %v625 = vsel %vm529, %v510, 0
        %v628 = vsel %vm529, %v511, 0
        %v631 = vsel %vm529, %v512, 0
        %v634 = vsel %vm529, %v513, 0
        %v637 = vsel %vm529, %v514, 0
        %639 = vmatprep.subr.mxu0 0.0
        %640 = vmatpush1.msra.mxu0 0.0
        %641 = vmatprep.subr.mxu0 0.0
        %642 = vmatpush1.msra.mxu0 0.0
        %643 = vmatprep.subr.mxu0 0.0
        %644 = vmatpush1.msra.mxu0 0.0
        %645 = vmatprep.subr.mxu0 0.0
        %646 = vmatpush1.msra.mxu0 0.0
        %647 = vmatprep.subr.mxu0 0.0
        %648 = vmatpush1.msra.mxu0 0.0
        %649 = vmatprep.subr.mxu0 0.0
        %650 = vmatpush1.msra.mxu0 0.0
        %651 = vmatprep.subr.mxu0 0.0
        %652 = vmatpush1.msra.mxu0 0.0
        %653 = vmatprep.subr.mxu0 0.0
        %654 = vmatpush1.msra.mxu0 0.0
        %655 = vmatprep.subr.mxu0 0.0
        %656 = vmatpush1.msra.mxu0 0.0
        %657 = vmatprep.subr.mxu0 0.0
        %658 = vmatpush1.msra.mxu0 0.0
        %659 = vmatprep.subr.mxu0 0.0
        %660 = vmatpush1.msra.mxu0 0.0
        %661 = vmatprep.subr.mxu0 0.0
        %662 = vmatpush1.msra.mxu0 0.0
        %663 = vmatprep.subr.mxu0 0.0
        %664 = vmatpush1.msra.mxu0 %v607
        %665 = vmatprep.subr.mxu0 0.0
        %666 = vmatpush1.msra.mxu0 %v606
        %667 = vmatprep.subr.mxu0 0.0
        %668 = vmatpush1.msra.mxu0 %v605
        %669 = vmatprep.subr.mxu0 0.0
        %670 = vmatpush1.msra.mxu0 %v604
        %671 = vmatprep.subr.mxu0 0.0
        %672 = vmatpush2.msra.mxu0 0.0
        %673 = vmatprep.subr.mxu0 0.0
        %674 = vmatpush2.msra.mxu0 0.0
        %675 = vmatprep.subr.mxu0 0.0
        %676 = vmatpush2.msra.mxu0 0.0
        %677 = vmatprep.subr.mxu0 0.0
        %678 = vmatpush2.msra.mxu0 0.0
        %679 = vmatprep.subr.mxu0 0.0
        %680 = vmatpush2.msra.mxu0 0.0
        %681 = vmatprep.subr.mxu0 0.0
        %682 = vmatpush2.msra.mxu0 0.0
        %683 = vmatprep.subr.mxu0 0.0
        %684 = vmatpush2.msra.mxu0 0.0
        %685 = vmatprep.subr.mxu0 0.0
        %686 = vmatpush2.msra.mxu0 0.0
        %687 = vmatprep.subr.mxu0 0.0
        %688 = vmatpush2.msra.mxu0 0.0
        %689 = vmatprep.subr.mxu0 0.0
        %690 = vmatpush2.msra.mxu0 0.0
        %691 = vmatprep.subr.mxu0 0.0
        %692 = vmatpush2.msra.mxu0 0.0
        %693 = vmatprep.subr.mxu0 0.0
        %694 = vmatpush2.msra.mxu0 0.0
        %695 = vmatprep.subr.mxu0 0.0
        %696 = vmatpush2.msra.mxu0 0.0
        %697 = vmatprep.subr.mxu0 0.0
        %698 = vmatpush2.msra.mxu0 0.0
        %699 = vmatprep.subr.mxu0 0.0
        %700 = vmatpush2.msra.mxu0 0.0
        %701 = vmatprep.subr.mxu0 0.0
        %702 = vmatpush2.msra.mxu0 0.0
        %703 = vmatprep.mubr.f32.mxu0 0.0
        %704 = vmatmul.mubr.f32.gmra.mxu0 %v616
        %v705 = vpop.f32.mrf.mxu0
        %v706 = vadd.f32 %v613, %v705
        %v707 = vpop.f32.mrf.mxu0
        %708 = vmatprep.mubr.f32.mxu0 0.0
        %709 = vmatmul.mubr.f32.gmra.mxu0 %v619
        %v710 = vpop.f32.mrf.mxu0
        %v711 = vadd.f32 %v613, %v710
        %v712 = vpop.f32.mrf.mxu0
        %713 = vmatprep.mubr.f32.mxu0 0.0
        %714 = vmatmul.mubr.f32.gmra.mxu0 %v622
        %v715 = vpop.f32.mrf.mxu0
        %v716 = vadd.f32 %v613, %v715
        %v717 = vpop.f32.mrf.mxu0
        %718 = vmatprep.mubr.f32.mxu0 0.0
        %719 = vmatmul.mubr.f32.gmra.mxu0 %v625
        %v720 = vpop.f32.mrf.mxu0
        %v721 = vadd.f32 %v613, %v720
        %v722 = vpop.f32.mrf.mxu0
        %723 = vmatprep.mubr.f32.mxu0 0.0
        %724 = vmatmul.mubr.f32.gmra.mxu0 %v628
        %v725 = vpop.f32.mrf.mxu0
        %v726 = vadd.f32 %v613, %v725
        %v727 = vpop.f32.mrf.mxu0
        %728 = vmatprep.mubr.f32.mxu0 0.0
        %729 = vmatmul.mubr.f32.gmra.mxu0 %v631
        %v730 = vpop.f32.mrf.mxu0
        %v731 = vadd.f32 %v613, %v730
        %v732 = vpop.f32.mrf.mxu0
        %733 = vmatprep.mubr.f32.mxu0 0.0
        %734 = vmatmul.mubr.f32.gmra.mxu0 %v634
        %v735 = vpop.f32.mrf.mxu0
        %v736 = vadd.f32 %v613, %v735
        %v737 = vpop.f32.mrf.mxu0
        %738 = vmatprep.mubr.f32.mxu0 0.0
        %739 = vmatmul.mubr.f32.gmra.mxu0 %v637
        %v740 = vpop.f32.mrf.mxu0
        %v741 = vadd.f32 %v613, %v740
        %v742 = vpop.f32.mrf.mxu0
        %743 = vdwg.mxu0
        %v744 = vld [vmem:[#allocation5] sm:$0xff]
        %v745 = vld [vmem:[#allocation5 + $0x8] sm:$0xff]
        %v746 = vld [vmem:[#allocation5 + $0x10] sm:$0xff]
        %v747 = vld [vmem:[#allocation5 + $0x18] sm:$0xff]
        %v748 = vld [vmem:[%s8] sm:$0x1]
        %v750 = vlaneseq
        %v751 = vshrl.u32 %v750, 7
        %v752 = vsub.s32 0, %v751
        %v753 = vrot.slane %v748, %v752
        %755 = vmatprep.subr.mxu0 0.0
        %756 = vmatpush1.msra.mxu0 0.0
        %757 = vmatprep.subr.mxu0 0.0
        %758 = vmatpush1.msra.mxu0 0.0
        %759 = vmatprep.subr.mxu0 0.0
        %760 = vmatpush1.msra.mxu0 0.0
        %761 = vmatprep.subr.mxu0 0.0
        %762 = vmatpush1.msra.mxu0 0.0
        %763 = vmatprep.subr.mxu0 0.0
        %764 = vmatpush1.msra.mxu0 0.0
        %765 = vmatprep.subr.mxu0 0.0
        %766 = vmatpush1.msra.mxu0 0.0
        %767 = vmatprep.subr.mxu0 0.0
        %768 = vmatpush1.msra.mxu0 0.0
        %769 = vmatprep.subr.mxu0 0.0
        %770 = vmatpush1.msra.mxu0 0.0
        %771 = vmatprep.subr.mxu0 0.0
        %772 = vmatpush1.msra.mxu0 0.0
        %773 = vmatprep.subr.mxu0 0.0
        %774 = vmatpush1.msra.mxu0 0.0
        %775 = vmatprep.subr.mxu0 0.0
        %776 = vmatpush1.msra.mxu0 0.0
        %777 = vmatprep.subr.mxu0 0.0
        %778 = vmatpush1.msra.mxu0 0.0
        %779 = vmatprep.subr.mxu0 0.0
        %780 = vmatpush1.msra.mxu0 %v747
        %781 = vmatprep.subr.mxu0 0.0
        %782 = vmatpush1.msra.mxu0 %v746
        %783 = vmatprep.subr.mxu0 0.0
        %784 = vmatpush1.msra.mxu0 %v745
        %785 = vmatprep.subr.mxu0 0.0
        %786 = vmatpush1.msra.mxu0 %v744
        %787 = vmatprep.subr.mxu0 0.0
        %788 = vmatpush2.msra.mxu0 0.0
        %789 = vmatprep.subr.mxu0 0.0
        %790 = vmatpush2.msra.mxu0 0.0
        %791 = vmatprep.subr.mxu0 0.0
        %792 = vmatpush2.msra.mxu0 0.0
        %793 = vmatprep.subr.mxu0 0.0
        %794 = vmatpush2.msra.mxu0 0.0
        %795 = vmatprep.subr.mxu0 0.0
        %796 = vmatpush2.msra.mxu0 0.0
        %797 = vmatprep.subr.mxu0 0.0
        %798 = vmatpush2.msra.mxu0 0.0
        %799 = vmatprep.subr.mxu0 0.0
        %800 = vmatpush2.msra.mxu0 0.0
        %801 = vmatprep.subr.mxu0 0.0
        %802 = vmatpush2.msra.mxu0 0.0
        %803 = vmatprep.subr.mxu0 0.0
        %804 = vmatpush2.msra.mxu0 0.0
        %805 = vmatprep.subr.mxu0 0.0
        %806 = vmatpush2.msra.mxu0 0.0
        %807 = vmatprep.subr.mxu0 0.0
        %808 = vmatpush2.msra.mxu0 0.0
        %809 = vmatprep.subr.mxu0 0.0
        %810 = vmatpush2.msra.mxu0 0.0
        %811 = vmatprep.subr.mxu0 0.0
        %812 = vmatpush2.msra.mxu0 0.0
        %813 = vmatprep.subr.mxu0 0.0
        %814 = vmatpush2.msra.mxu0 0.0
        %815 = vmatprep.subr.mxu0 0.0
        %816 = vmatpush2.msra.mxu0 0.0
        %817 = vmatprep.subr.mxu0 0.0
        %818 = vmatpush2.msra.mxu0 0.0
        %819 = vmatprep.mubr.f32.mxu0 0.0
        %820 = vmatmul.mubr.f32.gmra.mxu0 %v616
        %v821 = vpop.f32.mrf.mxu0
        %v822 = vadd.f32 %v753, %v821
        %v823 = vpop.f32.mrf.mxu0
        %824 = vmatprep.mubr.f32.mxu0 0.0
        %825 = vmatmul.mubr.f32.gmra.mxu0 %v619
        %v826 = vpop.f32.mrf.mxu0
        %v827 = vadd.f32 %v753, %v826
        %v828 = vpop.f32.mrf.mxu0
        %829 = vmatprep.mubr.f32.mxu0 0.0
        %830 = vmatmul.mubr.f32.gmra.mxu0 %v622
        %v831 = vpop.f32.mrf.mxu0
        %v832 = vadd.f32 %v753, %v831
        %v833 = vpop.f32.mrf.mxu0
        %834 = vmatprep.mubr.f32.mxu0 0.0
        %835 = vmatmul.mubr.f32.gmra.mxu0 %v625
        %v836 = vpop.f32.mrf.mxu0
        %v837 = vadd.f32 %v753, %v836
        %v838 = vpop.f32.mrf.mxu0
        %839 = vmatprep.mubr.f32.mxu0 0.0
        %840 = vmatmul.mubr.f32.gmra.mxu0 %v628
        %v841 = vpop.f32.mrf.mxu0
        %v842 = vadd.f32 %v753, %v841
        %v843 = vpop.f32.mrf.mxu0
        %844 = vmatprep.mubr.f32.mxu0 0.0
        %845 = vmatmul.mubr.f32.gmra.mxu0 %v631
        %v846 = vpop.f32.mrf.mxu0
        %v847 = vadd.f32 %v753, %v846
        %v848 = vpop.f32.mrf.mxu0
        %849 = vmatprep.mubr.f32.mxu0 0.0
        %850 = vmatmul.mubr.f32.gmra.mxu0 %v634
        %v851 = vpop.f32.mrf.mxu0
        %v852 = vadd.f32 %v753, %v851
        %v853 = vpop.f32.mrf.mxu0
        %854 = vmatprep.mubr.f32.mxu0 0.0
        %855 = vmatmul.mubr.f32.gmra.mxu0 %v637
        %v856 = vpop.f32.mrf.mxu0
        %v857 = vadd.f32 %v753, %v856
        %v858 = vpop.f32.mrf.mxu0
        %859 = vdwg.mxu0
        %v860 = vlaneseq
        %v861 = vshrl.u32 %v860, 7
        %v862 = vsub.s32 0, %v861
        %v863 = vrot.slane %v603, %v862
        %v864 = vmul.f32 %v706, %v863
        %v865 = vmul.f32 %v711, %v863
        %v866 = vmul.f32 %v716, %v863
        %v867 = vmul.f32 %v721, %v863
        %v868 = vmul.f32 %v726, %v863
        %v869 = vmul.f32 %v731, %v863
        %v870 = vmul.f32 %v736, %v863
        %v871 = vmul.f32 %v741, %v863
        %v872 = vld [vmem:[%s11] sm:$0xff]
        %v873 = vld [vmem:[%s11 + $0x8] sm:$0xff]
        %v874 = vld [vmem:[%s11 + $0x10] sm:$0xff]
        %v875 = vld [vmem:[%s11 + $0x18] sm:$0xff]
        %v877 = vsel %vm529, %v864, 0
        %v880 = vsel %vm529, %v865, 0
        %v883 = vsel %vm529, %v866, 0
        %v886 = vsel %vm529, %v867, 0
        %v889 = vsel %vm529, %v868, 0
        %v892 = vsel %vm529, %v869, 0
        %v895 = vsel %vm529, %v870, 0
        %v898 = vsel %vm529, %v871, 0
        %900 = vmatprep.subr.mxu0 0.0
        %901 = vmatpush1.msra.mxu0 0.0
        %902 = vmatprep.subr.mxu0 0.0
        %903 = vmatpush1.msra.mxu0 0.0
        %904 = vmatprep.subr.mxu0 0.0
        %905 = vmatpush1.msra.mxu0 0.0
        %906 = vmatprep.subr.mxu0 0.0
        %907 = vmatpush1.msra.mxu0 0.0
        %908 = vmatprep.subr.mxu0 0.0
        %909 = vmatpush1.msra.mxu0 0.0
        %910 = vmatprep.subr.mxu0 0.0
        %911 = vmatpush1.msra.mxu0 0.0
        %912 = vmatprep.subr.mxu0 0.0
        %913 = vmatpush1.msra.mxu0 0.0
        %914 = vmatprep.subr.mxu0 0.0
        %915 = vmatpush1.msra.mxu0 0.0
        %916 = vmatprep.subr.mxu0 0.0
        %917 = vmatpush1.msra.mxu0 0.0
        %918 = vmatprep.subr.mxu0 0.0
        %919 = vmatpush1.msra.mxu0 0.0
        %920 = vmatprep.subr.mxu0 0.0
        %921 = vmatpush1.msra.mxu0 0.0
        %922 = vmatprep.subr.mxu0 0.0
        %923 = vmatpush1.msra.mxu0 0.0
        %924 = vmatprep.subr.mxu0 0.0
        %925 = vmatpush1.msra.mxu0 %v875
        %926 = vmatprep.subr.mxu0 0.0
        %927 = vmatpush1.msra.mxu0 %v874
        %928 = vmatprep.subr.mxu0 0.0
        %929 = vmatpush1.msra.mxu0 %v873
        %930 = vmatprep.subr.mxu0 0.0
        %931 = vmatpush1.msra.mxu0 %v872
        %932 = vmatprep.subr.mxu0 0.0
        %933 = vmatpush2.msra.mxu0 0.0
        %934 = vmatprep.subr.mxu0 0.0
        %935 = vmatpush2.msra.mxu0 0.0
        %936 = vmatprep.subr.mxu0 0.0
        %937 = vmatpush2.msra.mxu0 0.0
        %938 = vmatprep.subr.mxu0 0.0
        %939 = vmatpush2.msra.mxu0 0.0
        %940 = vmatprep.subr.mxu0 0.0
        %941 = vmatpush2.msra.mxu0 0.0
        %942 = vmatprep.subr.mxu0 0.0
        %943 = vmatpush2.msra.mxu0 0.0
        %944 = vmatprep.subr.mxu0 0.0
        %945 = vmatpush2.msra.mxu0 0.0
        %946 = vmatprep.subr.mxu0 0.0
        %947 = vmatpush2.msra.mxu0 0.0
        %948 = vmatprep.subr.mxu0 0.0
        %949 = vmatpush2.msra.mxu0 0.0
        %950 = vmatprep.subr.mxu0 0.0
        %951 = vmatpush2.msra.mxu0 0.0
        %952 = vmatprep.subr.mxu0 0.0
        %953 = vmatpush2.msra.mxu0 0.0
        %954 = vmatprep.subr.mxu0 0.0
        %955 = vmatpush2.msra.mxu0 0.0
        %956 = vmatprep.subr.mxu0 0.0
        %957 = vmatpush2.msra.mxu0 0.0
        %958 = vmatprep.subr.mxu0 0.0
        %959 = vmatpush2.msra.mxu0 0.0
        %960 = vmatprep.subr.mxu0 0.0
        %961 = vmatpush2.msra.mxu0 0.0
        %962 = vmatprep.subr.mxu0 0.0
        %963 = vmatpush2.msra.mxu0 0.0
        %964 = vmatprep.mubr.f32.mxu0 0.0
        %965 = vmatmul.mubr.f32.gmra.mxu0 %v877
        %v966 = vpop.f32.mrf.mxu0
        %v967 = vadd.f32 0.0, %v966
        %v968 = vpop.f32.mrf.mxu0
        %969 = vmatprep.mubr.f32.mxu0 0.0
        %970 = vmatmul.mubr.f32.gmra.mxu0 %v880
        %v971 = vpop.f32.mrf.mxu0
        %v972 = vadd.f32 0.0, %v971
        %v973 = vpop.f32.mrf.mxu0
        %974 = vmatprep.mubr.f32.mxu0 0.0
        %975 = vmatmul.mubr.f32.gmra.mxu0 %v883
        %v976 = vpop.f32.mrf.mxu0
        %v977 = vadd.f32 0.0, %v976
        %v978 = vpop.f32.mrf.mxu0
        %979 = vmatprep.mubr.f32.mxu0 0.0
        %980 = vmatmul.mubr.f32.gmra.mxu0 %v886
        %v981 = vpop.f32.mrf.mxu0
        %v982 = vadd.f32 0.0, %v981
        %v983 = vpop.f32.mrf.mxu0
        %984 = vmatprep.mubr.f32.mxu0 0.0
        %985 = vmatmul.mubr.f32.gmra.mxu0 %v889
        %v986 = vpop.f32.mrf.mxu0
        %v987 = vadd.f32 0.0, %v986
        %v988 = vpop.f32.mrf.mxu0
        %989 = vmatprep.mubr.f32.mxu0 0.0
        %990 = vmatmul.mubr.f32.gmra.mxu0 %v892
        %v991 = vpop.f32.mrf.mxu0
        %v992 = vadd.f32 0.0, %v991
        %v993 = vpop.f32.mrf.mxu0
        %994 = vmatprep.mubr.f32.mxu0 0.0
        %995 = vmatmul.mubr.f32.gmra.mxu0 %v895
        %v996 = vpop.f32.mrf.mxu0
        %v997 = vadd.f32 0.0, %v996
        %v998 = vpop.f32.mrf.mxu0
        %999 = vmatprep.mubr.f32.mxu0 0.0
        %1000 = vmatmul.mubr.f32.gmra.mxu0 %v898
        %v1001 = vpop.f32.mrf.mxu0
        %v1002 = vadd.f32 0.0, %v1001
        %v1003 = vpop.f32.mrf.mxu0
        %1004 = vdwg.mxu0
        %1006 = vset.pattern.permute.xlu0 0
        %1007 = vperm.xlu0 %1006, %v515
        %v1008 = vpop.permute.xlu0 %1007
        %1011 = vset.pattern.permute.xlu0 0
        %1012 = vperm.xlu0 %1011, %v516
        %v1013 = vpop.permute.xlu0 %1012
        %1016 = vset.pattern.permute.xlu0 0
        %1017 = vperm.xlu0 %1016, %v517
        %v1018 = vpop.permute.xlu0 %1017
        %1021 = vset.pattern.permute.xlu0 0
        %1022 = vperm.xlu0 %1021, %v518
        %v1023 = vpop.permute.xlu0 %1022
        %1026 = vset.pattern.permute.xlu0 0
        %1027 = vperm.xlu0 %1026, %v519
        %v1028 = vpop.permute.xlu0 %1027
        %1031 = vset.pattern.permute.xlu0 0
        %1032 = vperm.xlu0 %1031, %v520
        %v1033 = vpop.permute.xlu0 %1032
        %1036 = vset.pattern.permute.xlu0 0
        %1037 = vperm.xlu0 %1036, %v521
        %v1038 = vpop.permute.xlu0 %1037
        %1041 = vset.pattern.permute.xlu0 0
        %1042 = vperm.xlu0 %1041, %v522
        %v1043 = vpop.permute.xlu0 %1042
        %v1045 = vmul.f32 %v967, %v1008
        %v1046 = vmul.f32 %v972, %v1013
        %v1047 = vmul.f32 %v977, %v1018
        %v1048 = vmul.f32 %v982, %v1023
        %v1049 = vmul.f32 %v987, %v1028
        %v1050 = vmul.f32 %v992, %v1033
        %v1051 = vmul.f32 %v997, %v1038
        %v1052 = vmul.f32 %v1002, %v1043
        %vm1053 = vcmask 31744
        %v1054 = vsel %vm1053, %v1045, -inf
        %v1055 = vrot.slane %v1054, 4
        %v1056 = vmax.f32 %v1054, %v1055
        %v1057 = vrot.slane %v1056, 2
        %v1058 = vmax.f32 %v1056, %v1057
        %v1059 = vrot.slane %v1058, 1
        %v1060 = vmax.f32 %v1058, %v1059
        %v1061 = vsel %vm1053, %v1046, -inf
        %v1062 = vrot.slane %v1061, 4
        %v1063 = vmax.f32 %v1061, %v1062
        %v1064 = vrot.slane %v1063, 2
        %v1065 = vmax.f32 %v1063, %v1064
        %v1066 = vrot.slane %v1065, 1
        %v1067 = vmax.f32 %v1065, %v1066
        %v1068 = vsel %vm1053, %v1047, -inf
        %v1069 = vrot.slane %v1068, 4
        %v1070 = vmax.f32 %v1068, %v1069
        %v1071 = vrot.slane %v1070, 2
        %v1072 = vmax.f32 %v1070, %v1071
        %v1073 = vrot.slane %v1072, 1
        %v1074 = vmax.f32 %v1072, %v1073
        %v1075 = vsel %vm1053, %v1048, -inf
        %v1076 = vrot.slane %v1075, 4
        %v1077 = vmax.f32 %v1075, %v1076
        %v1078 = vrot.slane %v1077, 2
        %v1079 = vmax.f32 %v1077, %v1078
        %v1080 = vrot.slane %v1079, 1
        %v1081 = vmax.f32 %v1079, %v1080
        %v1082 = vsel %vm1053, %v1049, -inf
        %v1083 = vrot.slane %v1082, 4
        %v1084 = vmax.f32 %v1082, %v1083
        %v1085 = vrot.slane %v1084, 2
        %v1086 = vmax.f32 %v1084, %v1085
        %v1087 = vrot.slane %v1086, 1
        %v1088 = vmax.f32 %v1086, %v1087
        %v1089 = vsel %vm1053, %v1050, -inf
        %v1090 = vrot.slane %v1089, 4
        %v1091 = vmax.f32 %v1089, %v1090
        %v1092 = vrot.slane %v1091, 2
        %v1093 = vmax.f32 %v1091, %v1092
        %v1094 = vrot.slane %v1093, 1
        %v1095 = vmax.f32 %v1093, %v1094
        %v1096 = vsel %vm1053, %v1051, -inf
        %v1097 = vrot.slane %v1096, 4
        %v1098 = vmax.f32 %v1096, %v1097
        %v1099 = vrot.slane %v1098, 2
        %v1100 = vmax.f32 %v1098, %v1099
        %v1101 = vrot.slane %v1100, 1
        %v1102 = vmax.f32 %v1100, %v1101
        %v1103 = vsel %vm1053, %v1052, -inf
        %v1104 = vrot.slane %v1103, 4
        %v1105 = vmax.f32 %v1103, %v1104
        %v1106 = vrot.slane %v1105, 2
        %v1107 = vmax.f32 %v1105, %v1106
        %v1108 = vrot.slane %v1107, 1
        %v1109 = vmax.f32 %v1107, %v1108
        %v1110 = vsub.f32 %v1045, %v1060
        %v1111 = vsub.f32 %v1046, %v1067
        %v1112 = vsub.f32 %v1047, %v1074
        %v1113 = vsub.f32 %v1048, %v1081
        %v1114 = vsub.f32 %v1049, %v1088
        %v1115 = vsub.f32 %v1050, %v1095
        %v1116 = vsub.f32 %v1051, %v1102
        %v1117 = vsub.f32 %v1052, %v1109
        %v1118 = vmul.f32 %v1110, 1.442695
        %v1119 = vpow.pop %v1118
        %v1120 = vmul.f32 %v1111, 1.442695
        %v1121 = vpow.pop %v1120
        %v1122 = vmul.f32 %v1112, 1.442695
        %v1123 = vpow.pop %v1122
        %v1124 = vmul.f32 %v1113, 1.442695
        %v1125 = vpow.pop %v1124
        %v1126 = vmul.f32 %v1114, 1.442695
        %v1127 = vpow.pop %v1126
        %v1128 = vmul.f32 %v1115, 1.442695
        %v1129 = vpow.pop %v1128
        %v1130 = vmul.f32 %v1116, 1.442695
        %v1131 = vpow.pop %v1130
        %v1132 = vmul.f32 %v1117, 1.442695
        %v1133 = vpow.pop %v1132
        %v1134 = vsel %vm1053, %v1119, 0.0
        %v1135 = vrot.slane %v1134, 4
        %v1136 = vadd.f32 %v1134, %v1135
        %v1137 = vrot.slane %v1136, 2
        %v1138 = vadd.f32 %v1136, %v1137
        %v1139 = vrot.slane %v1138, 1
        %v1140 = vadd.f32 %v1138, %v1139
        %v1141 = vsel %vm1053, %v1121, 0.0
        %v1142 = vrot.slane %v1141, 4
        %v1143 = vadd.f32 %v1141, %v1142
        %v1144 = vrot.slane %v1143, 2
        %v1145 = vadd.f32 %v1143, %v1144
        %v1146 = vrot.slane %v1145, 1
        %v1147 = vadd.f32 %v1145, %v1146
        %v1148 = vsel %vm1053, %v1123, 0.0
        %v1149 = vrot.slane %v1148, 4
        %v1150 = vadd.f32 %v1148, %v1149
        %v1151 = vrot.slane %v1150, 2
        %v1152 = vadd.f32 %v1150, %v1151
        %v1153 = vrot.slane %v1152, 1
        %v1154 = vadd.f32 %v1152, %v1153
        %v1155 = vsel %vm1053, %v1125, 0.0
        %v1156 = vrot.slane %v1155, 4
        %v1157 = vadd.f32 %v1155, %v1156
        %v1158 = vrot.slane %v1157, 2
        %v1159 = vadd.f32 %v1157, %v1158
        %v1160 = vrot.slane %v1159, 1
        %v1161 = vadd.f32 %v1159, %v1160
        %v1162 = vsel %vm1053, %v1127, 0.0
        %v1163 = vrot.slane %v1162, 4
        %v1164 = vadd.f32 %v1162, %v1163
        %v1165 = vrot.slane %v1164, 2
        %v1166 = vadd.f32 %v1164, %v1165
        %v1167 = vrot.slane %v1166, 1
        %v1168 = vadd.f32 %v1166, %v1167
        %v1169 = vsel %vm1053, %v1129, 0.0
        %v1170 = vrot.slane %v1169, 4
        %v1171 = vadd.f32 %v1169, %v1170
        %v1172 = vrot.slane %v1171, 2
        %v1173 = vadd.f32 %v1171, %v1172
        %v1174 = vrot.slane %v1173, 1
        %v1175 = vadd.f32 %v1173, %v1174
        %v1176 = vsel %vm1053, %v1131, 0.0
        %v1177 = vrot.slane %v1176, 4
        %v1178 = vadd.f32 %v1176, %v1177
        %v1179 = vrot.slane %v1178, 2
        %v1180 = vadd.f32 %v1178, %v1179
        %v1181 = vrot.slane %v1180, 1
        %v1182 = vadd.f32 %v1180, %v1181
        %v1183 = vsel %vm1053, %v1133, 0.0
        %v1184 = vrot.slane %v1183, 4
        %v1185 = vadd.f32 %v1183, %v1184
        %v1186 = vrot.slane %v1185, 2
        %v1187 = vadd.f32 %v1185, %v1186
        %v1188 = vrot.slane %v1187, 1
        %v1189 = vadd.f32 %v1187, %v1188
        %v1190 = vrcp.pop %v1140
        %v1191 = vrcp.pop %v1147
        %v1192 = vrcp.pop %v1154
        %v1193 = vrcp.pop %v1161
        %v1194 = vrcp.pop %v1168
        %v1195 = vrcp.pop %v1175
        %v1196 = vrcp.pop %v1182
        %v1197 = vrcp.pop %v1189
        %v1198 = vmul.f32 %v1119, %v1190
        %v1199 = vmul.f32 %v1121, %v1191
        %v1200 = vmul.f32 %v1123, %v1192
        %v1201 = vmul.f32 %v1125, %v1193
        %v1202 = vmul.f32 %v1127, %v1194
        %v1203 = vmul.f32 %v1129, %v1195
        %v1204 = vmul.f32 %v1131, %v1196
        %v1205 = vmul.f32 %v1133, %v1197
        %v1206 = vld [vmem:[%s12] sm:$0xf]
        %v1208 = vsel %vm1053, %v1198, 0
        %v1211 = vsel %vm1053, %v1199, 0
        %v1214 = vsel %vm1053, %v1200, 0
        %v1217 = vsel %vm1053, %v1201, 0
        %v1220 = vsel %vm1053, %v1202, 0
        %v1223 = vsel %vm1053, %v1203, 0
        %v1226 = vsel %vm1053, %v1204, 0
        %v1229 = vsel %vm1053, %v1205, 0
        %vm1231 = vcmask 1043456
        %v1233 = vsel %vm1231, %v1206, 0
        %1235 = vmatprep.subr.mxu0 0.0
        %1236 = vmatpush1.msra.mxu0 0.0
        %1237 = vmatprep.subr.mxu0 0.0
        %1238 = vmatpush1.msra.mxu0 0.0
        %1239 = vmatprep.subr.mxu0 0.0
        %1240 = vmatpush1.msra.mxu0 0.0
        %1241 = vmatprep.subr.mxu0 0.0
        %1242 = vmatpush1.msra.mxu0 0.0
        %1243 = vmatprep.subr.mxu0 0.0
        %1244 = vmatpush1.msra.mxu0 0.0
        %1245 = vmatprep.subr.mxu0 0.0
        %1246 = vmatpush1.msra.mxu0 0.0
        %1247 = vmatprep.subr.mxu0 0.0
        %1248 = vmatpush1.msra.mxu0 0.0
        %1249 = vmatprep.subr.mxu0 0.0
        %1250 = vmatpush1.msra.mxu0 0.0
        %1251 = vmatprep.subr.mxu0 0.0
        %1252 = vmatpush1.msra.mxu0 0.0
        %1253 = vmatprep.subr.mxu0 0.0
        %1254 = vmatpush1.msra.mxu0 0.0
        %1255 = vmatprep.subr.mxu0 0.0
        %1256 = vmatpush1.msra.mxu0 0.0
        %1257 = vmatprep.subr.mxu0 0.0
        %1258 = vmatpush1.msra.mxu0 0.0
        %1259 = vmatprep.subr.mxu0 0.0
        %1260 = vmatpush1.msra.mxu0 0.0
        %1261 = vmatprep.subr.mxu0 0.0
        %1262 = vmatpush1.msra.mxu0 0.0
        %1263 = vmatprep.subr.mxu0 0.0
        %1264 = vmatpush1.msra.mxu0 0.0
        %1265 = vmatprep.subr.mxu0 0.0
        %1266 = vmatpush1.msra.mxu0 %v1233
        %1267 = vmatprep.subr.mxu0 0.0
        %1268 = vmatpush2.msra.mxu0 0.0
        %1269 = vmatprep.subr.mxu0 0.0
        %1270 = vmatpush2.msra.mxu0 0.0
        %1271 = vmatprep.subr.mxu0 0.0
        %1272 = vmatpush2.msra.mxu0 0.0
        %1273 = vmatprep.subr.mxu0 0.0
        %1274 = vmatpush2.msra.mxu0 0.0
        %1275 = vmatprep.subr.mxu0 0.0
        %1276 = vmatpush2.msra.mxu0 0.0
        %1277 = vmatprep.subr.mxu0 0.0
        %1278 = vmatpush2.msra.mxu0 0.0
        %1279 = vmatprep.subr.mxu0 0.0
        %1280 = vmatpush2.msra.mxu0 0.0
        %1281 = vmatprep.subr.mxu0 0.0
        %1282 = vmatpush2.msra.mxu0 0.0
        %1283 = vmatprep.subr.mxu0 0.0
        %1284 = vmatpush2.msra.mxu0 0.0
        %1285 = vmatprep.subr.mxu0 0.0
        %1286 = vmatpush2.msra.mxu0 0.0
        %1287 = vmatprep.subr.mxu0 0.0
        %1288 = vmatpush2.msra.mxu0 0.0
        %1289 = vmatprep.subr.mxu0 0.0
        %1290 = vmatpush2.msra.mxu0 0.0
        %1291 = vmatprep.subr.mxu0 0.0
        %1292 = vmatpush2.msra.mxu0 0.0
        %1293 = vmatprep.subr.mxu0 0.0
        %1294 = vmatpush2.msra.mxu0 0.0
        %1295 = vmatprep.subr.mxu0 0.0
        %1296 = vmatpush2.msra.mxu0 0.0
        %1297 = vmatprep.subr.mxu0 0.0
        %1298 = vmatpush2.msra.mxu0 0.0
        %1299 = vmatprep.mubr.f32.mxu0 0.0
        %1300 = vmatmul.mubr.f32.gmra.mxu0 %v1208
        %v1301 = vpop.f32.mrf.mxu0
        %v1302 = vadd.f32 0.0, %v1301
        %v1303 = vpop.f32.mrf.mxu0
        %1304 = vmatprep.mubr.f32.mxu0 0.0
        %1305 = vmatmul.mubr.f32.gmra.mxu0 %v1211
        %v1306 = vpop.f32.mrf.mxu0
        %v1307 = vadd.f32 0.0, %v1306
        %v1308 = vpop.f32.mrf.mxu0
        %1309 = vmatprep.mubr.f32.mxu0 0.0
        %1310 = vmatmul.mubr.f32.gmra.mxu0 %v1214
        %v1311 = vpop.f32.mrf.mxu0
        %v1312 = vadd.f32 0.0, %v1311
        %v1313 = vpop.f32.mrf.mxu0
        %1314 = vmatprep.mubr.f32.mxu0 0.0
        %1315 = vmatmul.mubr.f32.gmra.mxu0 %v1217
        %v1316 = vpop.f32.mrf.mxu0
        %v1317 = vadd.f32 0.0, %v1316
        %v1318 = vpop.f32.mrf.mxu0
        %1319 = vmatprep.mubr.f32.mxu0 0.0
        %1320 = vmatmul.mubr.f32.gmra.mxu0 %v1220
        %v1321 = vpop.f32.mrf.mxu0
        %v1322 = vadd.f32 0.0, %v1321
        %v1323 = vpop.f32.mrf.mxu0
        %1324 = vmatprep.mubr.f32.mxu0 0.0
        %1325 = vmatmul.mubr.f32.gmra.mxu0 %v1223
        %v1326 = vpop.f32.mrf.mxu0
        %v1327 = vadd.f32 0.0, %v1326
        %v1328 = vpop.f32.mrf.mxu0
        %1329 = vmatprep.mubr.f32.mxu0 0.0
        %1330 = vmatmul.mubr.f32.gmra.mxu0 %v1226
        %v1331 = vpop.f32.mrf.mxu0
        %v1332 = vadd.f32 0.0, %v1331
        %v1333 = vpop.f32.mrf.mxu0
        %1334 = vmatprep.mubr.f32.mxu0 0.0
        %1335 = vmatmul.mubr.f32.gmra.mxu0 %v1229
        %v1336 = vpop.f32.mrf.mxu0
        %v1337 = vadd.f32 0.0, %v1336
        %v1338 = vpop.f32.mrf.mxu0
        %1339 = vdwg.mxu0
        %v1340 = vmul.f32 %v1302, %v822
        %v1341 = vmul.f32 %v1307, %v827
        %v1342 = vmul.f32 %v1312, %v832
        %v1343 = vmul.f32 %v1317, %v837
        %v1344 = vmul.f32 %v1322, %v842
        %v1345 = vmul.f32 %v1327, %v847
        %v1346 = vmul.f32 %v1332, %v852
        %v1347 = vmul.f32 %v1337, %v857
        %v1348 = vsel %vm529, %v1340, 0.0
        %v1349 = vrot.slane %v1348, 4
        %v1350 = vadd.f32 %v1348, %v1349
        %v1351 = vrot.slane %v1350, 2
        %v1352 = vadd.f32 %v1350, %v1351
        %v1353 = vrot.slane %v1352, 1
        %v1354 = vadd.f32 %v1352, %v1353
        %v1355 = vsel %vm529, %v1341, 0.0
        %v1356 = vrot.slane %v1355, 4
        %v1357 = vadd.f32 %v1355, %v1356
        %v1358 = vrot.slane %v1357, 2
        %v1359 = vadd.f32 %v1357, %v1358
        %v1360 = vrot.slane %v1359, 1
        %v1361 = vadd.f32 %v1359, %v1360
        %v1362 = vsel %vm529, %v1342, 0.0
        %v1363 = vrot.slane %v1362, 4
        %v1364 = vadd.f32 %v1362, %v1363
        %v1365 = vrot.slane %v1364, 2
        %v1366 = vadd.f32 %v1364, %v1365
        %v1367 = vrot.slane %v1366, 1
        %v1368 = vadd.f32 %v1366, %v1367
        %v1369 = vsel %vm529, %v1343, 0.0
        %v1370 = vrot.slane %v1369, 4
        %v1371 = vadd.f32 %v1369, %v1370
        %v1372 = vrot.slane %v1371, 2
        %v1373 = vadd.f32 %v1371, %v1372
        %v1374 = vrot.slane %v1373, 1
        %v1375 = vadd.f32 %v1373, %v1374
        %v1376 = vsel %vm529, %v1344, 0.0
        %v1377 = vrot.slane %v1376, 4
        %v1378 = vadd.f32 %v1376, %v1377
        %v1379 = vrot.slane %v1378, 2
        %v1380 = vadd.f32 %v1378, %v1379
        %v1381 = vrot.slane %v1380, 1
        %v1382 = vadd.f32 %v1380, %v1381
        %v1383 = vsel %vm529, %v1345, 0.0
        %v1384 = vrot.slane %v1383, 4
        %v1385 = vadd.f32 %v1383, %v1384
        %v1386 = vrot.slane %v1385, 2
        %v1387 = vadd.f32 %v1385, %v1386
        %v1388 = vrot.slane %v1387, 1
        %v1389 = vadd.f32 %v1387, %v1388
        %v1390 = vsel %vm529, %v1346, 0.0
        %v1391 = vrot.slane %v1390, 4
        %v1392 = vadd.f32 %v1390, %v1391
        %v1393 = vrot.slane %v1392, 2
        %v1394 = vadd.f32 %v1392, %v1393
        %v1395 = vrot.slane %v1394, 1
        %v1396 = vadd.f32 %v1394, %v1395
        %v1397 = vsel %vm529, %v1347, 0.0
        %v1398 = vrot.slane %v1397, 4
        %v1399 = vadd.f32 %v1397, %v1398
        %v1400 = vrot.slane %v1399, 2
        %v1401 = vadd.f32 %v1399, %v1400
        %v1402 = vrot.slane %v1401, 1
        %v1403 = vadd.f32 %v1401, %v1402
        %v1404 = vlaneseq
        %v1405 = vshrl.u32 %v1404, 7
        %v1406 = vsub.s32 0, %v1405
        %v1407 = vrot.slane %v600, %v1406
        %vm1416 = vcmask 1041409
        %v1417 = vsel %vm1416, %v1361, %v1354
        %vm1418 = vcmask 1042434
        %v1419 = vsel %vm1418, %v1368, %v1417
        %vm1420 = vcmask 1043459
        %v1421 = vsel %vm1420, %v1375, %v1419
        %vm1422 = vcmask 1044484
        %v1423 = vsel %vm1422, %v1382, %v1421
        %vm1424 = vcmask 1045509
        %v1425 = vsel %vm1424, %v1389, %v1423
        %vm1426 = vcmask 1046534
        %v1427 = vsel %vm1426, %v1396, %v1425
        %vm1428 = vcmask 1047559
        %v1429 = vsel %vm1428, %v1403, %v1427
        %v1431 = vadd.f32 %v1407, %v1429
        %v1432 = vld [vmem:[#allocation7] sm:$0xff]
        %v1433 = vld [vmem:[#allocation7 + $0x8] sm:$0xff]
        %v1434 = vld [vmem:[#allocation7 + $0x10] sm:$0xff]
        %v1435 = vld [vmem:[#allocation7 + $0x18] sm:$0xff]
        %v1436 = vld [vmem:[%s10] sm:$0x1]
        %v1438 = vlaneseq
        %v1439 = vshrl.u32 %v1438, 7
        %v1440 = vsub.s32 0, %v1439
        %v1441 = vrot.slane %v1436, %v1440
        %v1444 = vsel %vm529, %v1431, 0
        %1446 = vmatprep.subr.mxu0 0.0
        %1447 = vmatpush1.msra.mxu0 0.0
        %1448 = vmatprep.subr.mxu0 0.0
        %1449 = vmatpush1.msra.mxu0 0.0
        %1450 = vmatprep.subr.mxu0 0.0
        %1451 = vmatpush1.msra.mxu0 0.0
        %1452 = vmatprep.subr.mxu0 0.0
        %1453 = vmatpush1.msra.mxu0 0.0
        %1454 = vmatprep.subr.mxu0 0.0
        %1455 = vmatpush1.msra.mxu0 0.0
        %1456 = vmatprep.subr.mxu0 0.0
        %1457 = vmatpush1.msra.mxu0 0.0
        %1458 = vmatprep.subr.mxu0 0.0
        %1459 = vmatpush1.msra.mxu0 0.0
        %1460 = vmatprep.subr.mxu0 0.0
        %1461 = vmatpush1.msra.mxu0 0.0
        %1462 = vmatprep.subr.mxu0 0.0
        %1463 = vmatpush1.msra.mxu0 0.0
        %1464 = vmatprep.subr.mxu0 0.0
        %1465 = vmatpush1.msra.mxu0 0.0
        %1466 = vmatprep.subr.mxu0 0.0
        %1467 = vmatpush1.msra.mxu0 0.0
        %1468 = vmatprep.subr.mxu0 0.0
        %1469 = vmatpush1.msra.mxu0 0.0
        %1470 = vmatprep.subr.mxu0 0.0
        %1471 = vmatpush1.msra.mxu0 %v1435
        %1472 = vmatprep.subr.mxu0 0.0
        %1473 = vmatpush1.msra.mxu0 %v1434
        %1474 = vmatprep.subr.mxu0 0.0
        %1475 = vmatpush1.msra.mxu0 %v1433
        %1476 = vmatprep.subr.mxu0 0.0
        %1477 = vmatpush1.msra.mxu0 %v1432
        %1478 = vmatprep.subr.mxu0 0.0
        %1479 = vmatpush2.msra.mxu0 0.0
        %1480 = vmatprep.subr.mxu0 0.0
        %1481 = vmatpush2.msra.mxu0 0.0
        %1482 = vmatprep.subr.mxu0 0.0
        %1483 = vmatpush2.msra.mxu0 0.0
        %1484 = vmatprep.subr.mxu0 0.0
        %1485 = vmatpush2.msra.mxu0 0.0
        %1486 = vmatprep.subr.mxu0 0.0
        %1487 = vmatpush2.msra.mxu0 0.0
        %1488 = vmatprep.subr.mxu0 0.0
        %1489 = vmatpush2.msra.mxu0 0.0
        %1490 = vmatprep.subr.mxu0 0.0
        %1491 = vmatpush2.msra.mxu0 0.0
        %1492 = vmatprep.subr.mxu0 0.0
        %1493 = vmatpush2.msra.mxu0 0.0
        %1494 = vmatprep.subr.mxu0 0.0
        %1495 = vmatpush2.msra.mxu0 0.0
        %1496 = vmatprep.subr.mxu0 0.0
        %1497 = vmatpush2.msra.mxu0 0.0
        %1498 = vmatprep.subr.mxu0 0.0
        %1499 = vmatpush2.msra.mxu0 0.0
        %1500 = vmatprep.subr.mxu0 0.0
        %1501 = vmatpush2.msra.mxu0 0.0
        %1502 = vmatprep.subr.mxu0 0.0
        %1503 = vmatpush2.msra.mxu0 0.0
        %1504 = vmatprep.subr.mxu0 0.0
        %1505 = vmatpush2.msra.mxu0 0.0
        %1506 = vmatprep.subr.mxu0 0.0
        %1507 = vmatpush2.msra.mxu0 0.0
        %1508 = vmatprep.subr.mxu0 0.0
        %1509 = vmatpush2.msra.mxu0 0.0
        %1510 = vmatprep.mubr.f32.mxu0 0.0
        %1511 = vmatmul.mubr.f32.gmra.mxu0 %v1444
        %v1512 = vpop.f32.mrf.mxu0
        %v1513 = vadd.f32 %v1441, %v1512
        %v1514 = vpop.f32.mrf.mxu0
        %1515 = vdwg.mxu0
        %v1516 = vmax.f32 %v1513, 0.0
        %v1517 = vadd.f32 %v1431, %v1516
        %1518 = vst.msk [vmem:[%s494] sm:$0xff] %vm529, %v1517
        %s1519 = sand.u32 %s320, 1
        %s1520 = scalar_lea.sflag [#allocation4], %s1519
        %s1521 = sand.u32 %s320, 1
        %s1522 = smul.addr %s1521, 8
        %s1523 = scalar_lea.vmem [#allocation8], %s1522
        // Predicated region
        $region85: #{tpu_custom_call.1} parent=71 // pred_check
          %p1524 = pneg %p330
        $region86: #{tpu_custom_call.1} parent=71 // pred_check_branch
          %1526 = sbr.rel (%p1524) target = $region88
        $region87: #{tpu_custom_call.1} parent=71 // pred_region
          %s1528 = ssub.s32 128, 128
          %1529 = vsyncadd %s1520, %s1528
          %s1530 = smul.addr %s29, 128
          %s1531 = scalar_lea.hbm %s13, %s1530
          %s1533 = sshll.u32 %s1523, 4
          %s1534 = int_to_ptr.vmem [resolvable:$true] %s1533
          %1536 = dma.vmem_to_hbm [thread:$0]  %s1534, 128, %s1531, %s1520
        $region88: #{tpu_custom_call.1} parent=71 // pred_fallthru
          _
      $region72: #{tpu_custom_call.1} parent=5 // pred_fallthru
        _
      %p1537 = scmp.le.s32.totalorder 2, %s24
      // Predicated region
      $region89: #{tpu_custom_call.1} parent=5 // pred_check
        %p1538 = pneg %p1537
      $region90: #{tpu_custom_call.1} parent=5 // pred_check_branch
        %1540 = sbr.rel (%p1538) target = $region92
      $region91: #{tpu_custom_call.1} parent=5 // pred_region
        %s1541 = ssub.s32 %s24, 2
        // Predicated region
        $region93: #{tpu_custom_call.1} parent=91 // pred_check
          %p1542 = pneg %p336
        $region94: #{tpu_custom_call.1} parent=91 // pred_check_branch
          %1544 = sbr.rel (%p1542) target = $region96
        $region95: #{tpu_custom_call.1} parent=91 // pred_region
          %s1545 = sand.u32 %s321, 1
          %s1546 = scalar_lea.sflag [#allocation4], %s1545
          %s1547 = sand.u32 %s321, 1
          %s1548 = smul.addr %s1547, 8
          %s1549 = scalar_lea.vmem [#allocation8], %s1548
          %1550 = dma.done %s1546, 128
        $region96: #{tpu_custom_call.1} parent=91 // pred_fallthru
          _
      $region92: #{tpu_custom_call.1} parent=5 // pred_fallthru
        _
    $region6: #{tpu_custom_call.1} parent=1 // loop_footer
      %s28 = sadd.s32 1, %s24
    $region7: #{tpu_custom_call.1} parent=1 // loop_footer_branch
      %23 = sbr.rel target = $region3
    $region8: #{tpu_custom_call.1} parent=1 // loop_exit
      _
    %1551 = vsyncpa [#allocation3], 1
    %s1552 = scalar_lea.sflag [#allocation3], 1
    %1553 = vsyncpa %s1552, 1
    %1554 = vsyncpa [#allocation6], 1
    %1555 = vsyncpa [#allocation4], 1
    %s1556 = scalar_lea.sflag [#allocation4], 1
    %1557 = vsyncpa %s1556, 1

</llo_original>
